<compile_context>
chip_gen: v6e
topology: v6e:2x2x1
jax: 0.10.0
libtpu: 0.0.40
codegen_flags: <defaults>
</compile_context>

<pallas_src>
import jax
import jax.numpy as jnp
from jax.experimental import pallas as pl
from jax.experimental.pallas import tpu as pltpu


# ----------------------------- in-kernel helpers -----------------------------

def _make_taps(x_tile, rows, cols):
    """x_tile: (rows+2, cols+2, cin) -> (rows*cols, 9*cin) tap matrix.

    Column order is tap-major (kh, kw) then cin, matching the packed weights.
    The flatten keeps the last (lane) dim, and `cols` is a multiple of the sublane
    pack, so it is a pure vreg reinterpretation (no data movement).
    """
    pieces = [x_tile[kh:kh + rows, kw:kw + cols, :]
              for kh in range(3) for kw in range(3)]
    taps3 = jnp.concatenate(pieces, axis=-1)          # (rows, cols, 9*cin)
    return taps3.reshape(rows * cols, taps3.shape[-1])


def _octave_cbr_kernel(xh_m, xh_halo, xlo_m, xlo_halo,
                       w_h2h, w_lo_l2h, w_lo_sum, up, bias_h, bias_l,
                       out_h_ref, out_l_ref):
    """Fused OctaveCBR forward for one (batch, row-block) tile.

    Inputs (VMEM tiles):
      xh_m/xh_halo   : zero-padded high-res NHWC rows (+2-row halo), bf16
      xlo_m/xlo_halo : zero-padded [x_l | avgpool(x_h)] NHWC rows (+halo), bf16
      w_h2h          : (9*ch_in, ch_out)           BN-scale folded, bf16
      w_lo_l2h       : (9*(cl_in+ch_in), ch_out)   rows for pooled channels are zero
      w_lo_sum       : (9*(cl_in+ch_in), cl_out)   [w_l2l ; w_h2l] -> l2l + h2l in one pass
      up             : (rt*W, (rt/2)*(W/2)) f32 0/1 nearest-2x selection matrix
      bias_h/bias_l  : folded BN bias, f32
    """
    rt = xh_m.shape[1]
    cols_h = xh_m.shape[2] - 2
    rtl = xlo_m.shape[1]
    cols_l = xlo_m.shape[2] - 2

    # --- high-frequency branch: bf16 end-to-end (no f32 round trip on the big tile) ---
    xh = jnp.concatenate([xh_m[0], xh_halo[0]], axis=0)        # (rt+2, W+2, ch_in) bf16
    taps_h = _make_taps(xh, rt, cols_h)                        # (Mh, 9*ch_in) bf16
    y_h2h = jnp.dot(taps_h, w_h2h[...], preferred_element_type=jnp.float32)

    # --- low-frequency branch: x_l and pooled x_h are channel-concatenated, so ONE tap
    #     matrix feeds both matmuls and l2l + h2l is a single MXU accumulation.
    #     (Assembled in f32 because W/2 may be < the bf16 sublane pack; one cast.)
    xlo = jnp.concatenate([xlo_m[0].astype(jnp.float32),
                           xlo_halo[0].astype(jnp.float32)], axis=0)
    taps_lo = _make_taps(xlo, rtl, cols_l).astype(jnp.bfloat16)  # (Ml, 9*(cl_in+ch_in))
    y_l2h = jnp.dot(taps_lo, w_lo_l2h[...], preferred_element_type=jnp.float32)
    y_lsum = jnp.dot(taps_lo, w_lo_sum[...], preferred_element_type=jnp.float32)

    # low-frequency output: relu(l2l + h2l + bias_l); BN scale already in the weights.
    out_l = jnp.maximum(y_lsum + bias_l[...], 0.0)
    out_l_ref[...] = out_l.reshape(out_l_ref.shape)

    # high-frequency output: h2h + nearest-2x upsample(l2h) + bias, ReLU — all in VMEM.
    # `up` is a constant 0/1 matrix, so this f32 matmul is an exact row-gather of
    # y_l2h onto the high-res pixel grid (no relayout, no HBM round trip for l2h).
    y_l2h_up = jnp.dot(up[...], y_l2h, preferred_element_type=jnp.float32)  # (Mh, ch_out)
    out_h = jnp.maximum(y_h2h + y_l2h_up + bias_h[...], 0.0)
    out_h_ref[...] = out_h.reshape(out_h_ref.shape)


# ----------------------------- tiling / budget helpers -----------------------------

def _tpu_vmem_capacity_bytes():
    """Per-core VMEM capacity; conservative 64 MiB fallback (v7x) if the query fails."""
    cap = 64 * 1024 * 1024
    try:
        info = pltpu.get_tpu_info()
        attr = getattr(info, "vmem_capacity_bytes", None)
        if attr:
            cap = int(attr)
    except Exception:
        pass
    return cap


def _estimate_tile_vmem_bytes(rt, w, wl, ch_in, c_lo, ch_out, cl_out):
    """Rough per-grid-step VMEM working set (double-buffered streams + scratch)."""
    rtl = rt // 2
    mh, ml = rt * w, rtl * wl
    bf, f4 = 2, 4
    stream = ((rt + 2) * (w + 2) * ch_in * bf            # hi main + halo
              + (rtl + 2) * (wl + 2) * c_lo * bf         # lo main + halo
              + mh * ch_out * f4 + ml * cl_out * f4)     # output blocks
    resident = ((9 * c_lo * (ch_out + cl_out) + 9 * ch_in * ch_out) * bf
                + mh * ml * f4 + (ch_out + cl_out) * f4)
    work = (mh * 9 * ch_in * bf                          # high tap matrix (bf16)
            + ml * 9 * c_lo * (f4 + bf)                  # low tap matrix f32 + bf16 copy
            + (2 * mh * ch_out + ml * (ch_out + cl_out)) * f4   # f32 matmul results
            + 2 * (rt + 2) * (w + 2) * ch_in * bf)       # halo'd tile copy / slice slack
    return 2 * stream + resident + work


def _pick_row_tile(h, n_batch, est_fn, budget):
    """Largest row tile (multiple of 4, divides H) that fits the VMEM budget while
    keeping >= 4 (else >= 2) parallel (batch x row-block) units for megacore."""
    cands = sorted([t for t in range(4, h + 1, 4) if h % t == 0], reverse=True)
    if not cands:
        raise ValueError(f"spatial height {h} needs a divisor that is a multiple of 4")
    feasible = [t for t in cands if est_fn(t) <= budget] or [cands[-1]]
    for min_units in (4, 2, 1):
        ok = [t for t in feasible if n_batch * (h // t) >= min_units]
        if ok:
            return ok[0]
    return feasible[-1]


# ----------------------------- pallas_call wrapper -----------------------------

def _octave_cbr_call(xh_pad, xlo_pad, w_h2h, w_lo_l2h, w_lo_sum, bias_h, bias_l, rt):
    n, hp, wp, ch_in = xh_pad.shape
    h, w = hp - 2, wp - 2
    _, hlp, wlp, c_lo = xlo_pad.shape
    hl, wl = hlp - 2, wlp - 2
    ch_out = w_h2h.shape[-1]
    cl_out = w_lo_sum.shape[-1]
    rtl = rt // 2

    # Guard the halo / flatten assumptions explicitly (review correctness concern).
    assert rt % 4 == 0 and h % rt == 0, (rt, h)
    assert hl * 2 == h and wl * 2 == w, (h, w, hl, wl)
    assert w % 16 == 0 and wl % 8 == 0, "tap flatten assumes sublane-aligned widths"

    # Exact nearest-neighbour 2x upsample as a 0/1 selection matrix over one tile.
    up = jnp.kron(
        jnp.kron(jnp.eye(rtl, dtype=jnp.float32), jnp.ones((2, 1), jnp.float32)),
        jnp.kron(jnp.eye(wl, dtype=jnp.float32), jnp.ones((2, 1), jnp.float32)))
    # up.shape == (rt * w, rtl * wl)

    grid = (n, h // rt)
    main_h = lambda ni, rb: (ni, rb, 0, 0)
    halo_h = lambda ni, rb: (ni, (rb + 1) * (rt // 2), 0, 0)     # 2 rows below the block
    main_l = lambda ni, rb: (ni, rb, 0, 0)
    halo_l = lambda ni, rb: (ni, (rb + 1) * (rtl // 2), 0, 0)
    whole2 = lambda ni, rb: (0, 0)                               # resident weights / bias

    # Advisory cost estimate for XLA scheduling around the call.
    flops = 2 * n * (h // rt) * (rt * w * 9 * ch_in * ch_out
                                 + rtl * wl * 9 * c_lo * (ch_out + cl_out)
                                 + rt * w * rtl * wl * ch_out)
    bytes_accessed = int((xh_pad.size + xlo_pad.size) * 2
                         + (w_h2h.size + w_lo_l2h.size + w_lo_sum.size) * 2
                         + up.size * 4
                         + (n * h * w * ch_out + n * hl * wl * cl_out) * 4)
    cost = pl.CostEstimate(flops=int(flops), transcendentals=0,
                           bytes_accessed=bytes_accessed)

    vmem_cap = _tpu_vmem_capacity_bytes()
    vmem_limit = int(max(32 * 1024 * 1024, min(vmem_cap * 3 // 4, 100 * 1024 * 1024)))
    compiler_params = pltpu.CompilerParams(
        dimension_semantics=("parallel", "parallel"),
        vmem_limit_bytes=vmem_limit)

    return pl.pallas_call(
        _octave_cbr_kernel,
        grid=grid,
        in_specs=[
            pl.BlockSpec((1, rt, wp, ch_in), main_h),     # x_h main rows
            pl.BlockSpec((1, 2, wp, ch_in), halo_h),      # x_h halo rows
            pl.BlockSpec((1, rtl, wlp, c_lo), main_l),    # [x_l | pool(x_h)] main rows
            pl.BlockSpec((1, 2, wlp, c_lo), halo_l),      # [x_l | pool(x_h)] halo rows
            pl.BlockSpec((9 * ch_in, ch_out), whole2),    # w_h2h
            pl.BlockSpec((9 * c_lo, ch_out), whole2),     # w_lo_l2h
            pl.BlockSpec((9 * c_lo, cl_out), whole2),     # w_lo_sum  ([w_l2l ; w_h2l])
            pl.BlockSpec((rt * w, rtl * wl), whole2),     # nearest-2x selection matrix
            pl.BlockSpec((1, ch_out), whole2),            # bias_h
            pl.BlockSpec((1, cl_out), whole2),            # bias_l
        ],
        out_specs=(
            pl.BlockSpec((1, rt, w, ch_out), main_h),
            pl.BlockSpec((1, rtl, wl, cl_out), main_l),
        ),
        out_shape=(
            jax.ShapeDtypeStruct((n, h, w, ch_out), jnp.float32),
            jax.ShapeDtypeStruct((n, hl, wl, cl_out), jnp.float32),
        ),
        cost_estimate=cost,
        compiler_params=compiler_params,
    )(xh_pad, xh_pad, xlo_pad, xlo_pad,
      w_h2h, w_lo_l2h, w_lo_sum, up, bias_h, bias_l)


# ----------------------------- Glue (plain JAX) -----------------------------

def avg_pool2x2(x):                       # NHWC, kernel 2x2, stride 2
    n, h, w, c = x.shape
    return x.reshape(n, h // 2, 2, w // 2, 2, c).mean(axis=(2, 4))


def upsample2x_nearest(x):                # NHWC, nearest-neighbor x2 (reference only)
    return jnp.repeat(jnp.repeat(x, 2, axis=1), 2, axis=2)


def _pad_hw_bf16(x):
    return jnp.pad(x.astype(jnp.bfloat16), ((0, 0), (1, 1), (1, 1), (0, 0)))


def fold_bn_to_hwio(w_oihw, scale):
    """PyTorch (Cout,Cin,3,3) f32 weight with BN scale folded -> HWIO bf16."""
    w = w_oihw * scale[:, None, None, None]
    return jnp.transpose(w, (2, 3, 1, 0)).astype(jnp.bfloat16)    # (3,3,Cin,Cout)


def octave_cbr_forward(x_h, x_l, params, stride=1):
    """OctaveCBR.forward semantics (stride=1 path), NHWC f32 in / NHWC f32 out."""
    if stride == 2:
        x_h, x_l = avg_pool2x2(x_h), avg_pool2x2(x_l)
    n, h, w, ch_in = x_h.shape

    xp = avg_pool2x2(x_h)                                   # h2l conv input
    x_low = jnp.concatenate([x_l, xp], axis=-1)             # merge low-branch inputs
    xh_pad = _pad_hw_bf16(x_h)
    xlo_pad = _pad_hw_bf16(x_low)

    c_lo = x_low.shape[-1]
    ch_out = params['w_h2h'].shape[-1]
    cl_out = params['w_lo_sum'].shape[-1]

    cap = _tpu_vmem_capacity_bytes()
    budget = int(cap * 0.55)                                # leave headroom (v7x: 64 MiB/TC)
    est = lambda rt: _estimate_tile_vmem_bytes(rt, w, w // 2, ch_in, c_lo, ch_out, cl_out)
    rt = _pick_row_tile(h, n, est, budget)

    return _octave_cbr_call(xh_pad, xlo_pad, params['w_h2h'], params['w_lo_l2h'],
                            params['w_lo_sum'], params['bias_h'], params['bias_l'], rt)


# ----------------------------- Pure-JAX reference -----------------------------

def _conv3x3_ref(x_bf16, w_hwio_bf16):
    return jax.lax.conv_general_dilated(
        x_bf16, w_hwio_bf16, window_strides=(1, 1), padding=((1, 1), (1, 1)),
        dimension_numbers=('NHWC', 'HWIO', 'NHWC'),
        preferred_element_type=jnp.float32)


def octave_cbr_reference(x_h, x_l, w_hwio, bias_h, bias_l):
    """Reference with identical bf16 activations/weights + f32 accumulation."""
    xh = x_h.astype(jnp.bfloat16)
    xl = x_l.astype(jnp.bfloat16)
    xp = avg_pool2x2(x_h).astype(jnp.bfloat16)
    y_h2h = _conv3x3_ref(xh, w_hwio['h2h'])
    y_l2h = _conv3x3_ref(xl, w_hwio['l2h'])
    y_l2l = _conv3x3_ref(xl, w_hwio['l2l'])
    y_h2l = _conv3x3_ref(xp, w_hwio['h2l'])
    out_h = jnp.maximum(upsample2x_nearest(y_l2h) + y_h2h + bias_h, 0.0)
    out_l = jnp.maximum(y_h2l + y_l2l + bias_l, 0.0)
    return out_h, out_l


# ----------------------------- Main -----------------------------

if __name__ == "__main__":
    key = jax.random.PRNGKey(0)
    in_channels, out_channels, alpha = 8, 8, 0.5
    N, H, W = 2, 16, 16
    ch_in = in_channels - int(alpha * in_channels)     # high-freq in  = 4
    cl_in = int(alpha * in_channels)                   # low-freq  in  = 4
    ch_out = out_channels - int(alpha * out_channels)  # high-freq out = 4
    cl_out = int(alpha * out_channels)                 # low-freq  out = 4

    keys = jax.random.split(key, 12)

    # Inputs built in PyTorch NCHW convention, then moved to NHWC for TPU.
    x_h = jnp.transpose(
        jax.random.normal(keys[0], (N, ch_in, H, W), jnp.float32), (0, 2, 3, 1))
    x_l = jnp.transpose(
        jax.random.normal(keys[1], (N, cl_in, H // 2, W // 2), jnp.float32), (0, 2, 3, 1))

    def conv_w(k, cout, cin):
        return jax.random.normal(k, (cout, cin, 3, 3), jnp.float32) / jnp.sqrt(cin * 9.0)

    torch_w = {
        'h2h': conv_w(keys[2], ch_out, ch_in),
        'l2h': conv_w(keys[3], ch_out, cl_in),
        'h2l': conv_w(keys[4], cl_out, ch_in),
        'l2l': conv_w(keys[5], cl_out, cl_in),
    }

    # BatchNorm (inference form) -> per-channel scale/bias.
    eps = 1e-5
    def bn_fold(kg, kb, km, kv, c):
        gamma = 1.0 + 0.1 * jax.random.normal(kg, (c,), jnp.float32)
        beta = 0.1 * jax.random.normal(kb, (c,), jnp.float32)
        mean = 0.1 * jax.random.normal(km, (c,), jnp.float32)
        var = 1.0 + 0.1 * jax.random.uniform(kv, (c,), jnp.float32)
        scale = gamma / jnp.sqrt(var + eps)
        bias = beta - mean * scale
        return scale, bias

    scale_h, bias_h = bn_fold(keys[6], keys[7], keys[8], keys[9], ch_out)
    scale_l, bias_l = bn_fold(keys[10], keys[11], keys[8], keys[9], cl_out)

    # Fold BN scale into the conv weights (linear); the kernel only adds bias + ReLU.
    w_h2h_hwio = fold_bn_to_hwio(torch_w['h2h'], scale_h)    # (3,3,ch_in,ch_out)
    w_l2h_hwio = fold_bn_to_hwio(torch_w['l2h'], scale_h)    # (3,3,cl_in,ch_out)
    w_h2l_hwio = fold_bn_to_hwio(torch_w['h2l'], scale_l)    # (3,3,ch_in,cl_out)
    w_l2l_hwio = fold_bn_to_hwio(torch_w['l2l'], scale_l)    # (3,3,cl_in,cl_out)

    # Merged low-branch weights.  Input channels are ordered [x_l | pooled x_h]
    # (matching the channel concat in the wrapper); rows are tap-major (kh, kw, cin).
    #   w_lo_l2h : l2h weights, zero rows for the pooled-x_h channels.
    #   w_lo_sum : [w_l2l ; w_h2l]  -> y_l2l + y_h2l in a single MXU accumulation.
    l2h_block = jnp.concatenate(
        [w_l2h_hwio, jnp.zeros((3, 3, ch_in, ch_out), jnp.bfloat16)], axis=2)
    sum_block = jnp.concatenate([w_l2l_hwio, w_h2l_hwio], axis=2)
    c_lo = cl_in + ch_in
    params = {
        'w_h2h': w_h2h_hwio.reshape(9 * ch_in, ch_out),
        'w_lo_l2h': l2h_block.reshape(9 * c_lo, ch_out),
        'w_lo_sum': sum_block.reshape(9 * c_lo, cl_out),
        'bias_h': bias_h.reshape(1, ch_out),
        'bias_l': bias_l.reshape(1, cl_out),
    }

    fwd = jax.jit(lambda xh, xl: octave_cbr_forward(xh, xl, params))
    out_h, out_l = fwd(x_h, x_l)
    out_h = jax.block_until_ready(out_h)
    out_l = jax.block_until_ready(out_l)

    w_hwio = {'h2h': w_h2h_hwio, 'l2h': w_l2h_hwio, 'h2l': w_h2l_hwio, 'l2l': w_l2l_hwio}
    ref_h, ref_l = octave_cbr_reference(x_h, x_l, w_hwio, bias_h, bias_l)

    assert out_h.shape == (N, H, W, ch_out), out_h.shape
    assert out_l.shape == (N, H // 2, W // 2, cl_out), out_l.shape
    err_h = float(jnp.max(jnp.abs(out_h - ref_h)))
    err_l = float(jnp.max(jnp.abs(out_l - ref_l)))
    assert err_h < 1e-3 and err_l < 1e-3, (err_h, err_l)

    print("KERNEL_OK")
</pallas_src>

<mosaic_0001>
module attributes {stable_mosaic.version = 11 : i64} {
  func.func @_octave_cbr_kernel(%arg0: i32, %arg1: i32, %arg2: memref<1x8x18x4xbf16, #tpu.memory_space<vmem>>, %arg3: memref<1x2x18x4xbf16, #tpu.memory_space<vmem>>, %arg4: memref<1x4x10x8xbf16, #tpu.memory_space<vmem>>, %arg5: memref<1x2x10x8xbf16, #tpu.memory_space<vmem>>, %arg6: memref<36x4xbf16, #tpu.memory_space<vmem>>, %arg7: memref<72x4xbf16, #tpu.memory_space<vmem>>, %arg8: memref<72x4xbf16, #tpu.memory_space<vmem>>, %arg9: memref<128x32xf32, #tpu.memory_space<vmem>>, %arg10: memref<1x4xf32, #tpu.memory_space<vmem>>, %arg11: memref<1x4xf32, #tpu.memory_space<vmem>>, %arg12: memref<1x8x16x4xf32, #tpu.memory_space<vmem>>, %arg13: memref<1x4x8x4xf32, #tpu.memory_space<vmem>>) attributes {dimension_semantics = [#tpu.dimension_semantics<parallel>, #tpu.dimension_semantics<parallel>], iteration_bounds = array<i64: 2, 2>, scalar_prefetch = 0 : i64, scratch_operands = 0 : i64, tpu.core_type = #tpu.core_type<tc>, window_params = [{transform_indices = @transform_0, window_bounds = array<i64: 1, 8, 18, 4>}, {transform_indices = @transform_1, window_bounds = array<i64: 1, 2, 18, 4>}, {transform_indices = @transform_2, window_bounds = array<i64: 1, 4, 10, 8>}, {transform_indices = @transform_3, window_bounds = array<i64: 1, 2, 10, 8>}, {pipeline_mode = #tpu.pipeline_mode<synchronous>, transform_indices = @transform_4, window_bounds = array<i64: 36, 4>}, {pipeline_mode = #tpu.pipeline_mode<synchronous>, transform_indices = @transform_5, window_bounds = array<i64: 72, 4>}, {pipeline_mode = #tpu.pipeline_mode<synchronous>, transform_indices = @transform_6, window_bounds = array<i64: 72, 4>}, {pipeline_mode = #tpu.pipeline_mode<synchronous>, transform_indices = @transform_7, window_bounds = array<i64: 128, 32>}, {pipeline_mode = #tpu.pipeline_mode<synchronous>, transform_indices = @transform_8, window_bounds = array<i64: 1, 4>}, {pipeline_mode = #tpu.pipeline_mode<synchronous>, transform_indices = @transform_9, window_bounds = array<i64: 1, 4>}, {transform_indices = @transform_10, window_bounds = array<i64: 1, 8, 16, 4>}, {transform_indices = @transform_11, window_bounds = array<i64: 1, 4, 8, 4>}]} {
    %c0 = arith.constant 0 : index
    %c0_0 = arith.constant 0 : index
    %c0_1 = arith.constant 0 : index
    %c0_2 = arith.constant 0 : index
    %0 = vector.load %arg2[%c0, %c0_0, %c0_1, %c0_2] : memref<1x8x18x4xbf16, #tpu.memory_space<vmem>>, vector<1x8x18x4xbf16>
    %1 = vector.shape_cast %0 : vector<1x8x18x4xbf16> to vector<8x18x4xbf16>
    %c0_3 = arith.constant 0 : index
    %c0_4 = arith.constant 0 : index
    %c0_5 = arith.constant 0 : index
    %c0_6 = arith.constant 0 : index
    %2 = vector.load %arg3[%c0_3, %c0_4, %c0_5, %c0_6] : memref<1x2x18x4xbf16, #tpu.memory_space<vmem>>, vector<1x2x18x4xbf16>
    %3 = vector.shape_cast %2 : vector<1x2x18x4xbf16> to vector<2x18x4xbf16>
    %4 = tpu.concatenate %1, %3 in 0 : vector<8x18x4xbf16>, vector<2x18x4xbf16> -> vector<10x18x4xbf16>
    %5 = vector.extract_strided_slice %4 {offsets = [0, 0, 0], sizes = [8, 16, 4], strides = [1, 1, 1]} : vector<10x18x4xbf16> to vector<8x16x4xbf16>
    %6 = vector.extract_strided_slice %4 {offsets = [0, 1, 0], sizes = [8, 16, 4], strides = [1, 1, 1]} : vector<10x18x4xbf16> to vector<8x16x4xbf16>
    %7 = vector.extract_strided_slice %4 {offsets = [0, 2, 0], sizes = [8, 16, 4], strides = [1, 1, 1]} : vector<10x18x4xbf16> to vector<8x16x4xbf16>
    %8 = vector.extract_strided_slice %4 {offsets = [1, 0, 0], sizes = [8, 16, 4], strides = [1, 1, 1]} : vector<10x18x4xbf16> to vector<8x16x4xbf16>
    %9 = vector.extract_strided_slice %4 {offsets = [1, 1, 0], sizes = [8, 16, 4], strides = [1, 1, 1]} : vector<10x18x4xbf16> to vector<8x16x4xbf16>
    %10 = vector.extract_strided_slice %4 {offsets = [1, 2, 0], sizes = [8, 16, 4], strides = [1, 1, 1]} : vector<10x18x4xbf16> to vector<8x16x4xbf16>
    %11 = vector.extract_strided_slice %4 {offsets = [2, 0, 0], sizes = [8, 16, 4], strides = [1, 1, 1]} : vector<10x18x4xbf16> to vector<8x16x4xbf16>
    %12 = vector.extract_strided_slice %4 {offsets = [2, 1, 0], sizes = [8, 16, 4], strides = [1, 1, 1]} : vector<10x18x4xbf16> to vector<8x16x4xbf16>
    %13 = vector.extract_strided_slice %4 {offsets = [2, 2, 0], sizes = [8, 16, 4], strides = [1, 1, 1]} : vector<10x18x4xbf16> to vector<8x16x4xbf16>
    %14 = tpu.concatenate %5, %6, %7, %8, %9, %10, %11, %12, %13 in 2 : vector<8x16x4xbf16>, vector<8x16x4xbf16>, vector<8x16x4xbf16>, vector<8x16x4xbf16>, vector<8x16x4xbf16>, vector<8x16x4xbf16>, vector<8x16x4xbf16>, vector<8x16x4xbf16>, vector<8x16x4xbf16> -> vector<8x16x36xbf16>
    %15 = vector.shape_cast %14 : vector<8x16x36xbf16> to vector<128x36xbf16>
    %c0_7 = arith.constant 0 : index
    %c0_8 = arith.constant 0 : index
    %16 = vector.load %arg6[%c0_7, %c0_8] : memref<36x4xbf16, #tpu.memory_space<vmem>>, vector<36x4xbf16>
    %cst = arith.constant dense<0.000000e+00> : vector<128x4xf32>
    %17 = tpu.matmul %15, %16, %cst {dimension_numbers = #tpu.dot_dimension_numbers<[1], [0], [0], [1], [0, 0, 1, 1], [], []>} : vector<128x36xbf16>, vector<36x4xbf16>, vector<128x4xf32> -> vector<128x4xf32>
    %c0_9 = arith.constant 0 : index
    %c0_10 = arith.constant 0 : index
    %c0_11 = arith.constant 0 : index
    %c0_12 = arith.constant 0 : index
    %18 = vector.load %arg4[%c0_9, %c0_10, %c0_11, %c0_12] : memref<1x4x10x8xbf16, #tpu.memory_space<vmem>>, vector<1x4x10x8xbf16>
    %19 = vector.shape_cast %18 : vector<1x4x10x8xbf16> to vector<4x10x8xbf16>
    %20 = arith.extf %19 : vector<4x10x8xbf16> to vector<4x10x8xf32>
    %c0_13 = arith.constant 0 : index
    %c0_14 = arith.constant 0 : index
    %c0_15 = arith.constant 0 : index
    %c0_16 = arith.constant 0 : index
    %21 = vector.load %arg5[%c0_13, %c0_14, %c0_15, %c0_16] : memref<1x2x10x8xbf16, #tpu.memory_space<vmem>>, vector<1x2x10x8xbf16>
    %22 = vector.shape_cast %21 : vector<1x2x10x8xbf16> to vector<2x10x8xbf16>
    %23 = arith.extf %22 : vector<2x10x8xbf16> to vector<2x10x8xf32>
    %24 = tpu.concatenate %20, %23 in 0 : vector<4x10x8xf32>, vector<2x10x8xf32> -> vector<6x10x8xf32>
    %25 = vector.extract_strided_slice %24 {offsets = [0, 0, 0], sizes = [4, 8, 8], strides = [1, 1, 1]} : vector<6x10x8xf32> to vector<4x8x8xf32>
    %26 = vector.extract_strided_slice %24 {offsets = [0, 1, 0], sizes = [4, 8, 8], strides = [1, 1, 1]} : vector<6x10x8xf32> to vector<4x8x8xf32>
    %27 = vector.extract_strided_slice %24 {offsets = [0, 2, 0], sizes = [4, 8, 8], strides = [1, 1, 1]} : vector<6x10x8xf32> to vector<4x8x8xf32>
    %28 = vector.extract_strided_slice %24 {offsets = [1, 0, 0], sizes = [4, 8, 8], strides = [1, 1, 1]} : vector<6x10x8xf32> to vector<4x8x8xf32>
    %29 = vector.extract_strided_slice %24 {offsets = [1, 1, 0], sizes = [4, 8, 8], strides = [1, 1, 1]} : vector<6x10x8xf32> to vector<4x8x8xf32>
    %30 = vector.extract_strided_slice %24 {offsets = [1, 2, 0], sizes = [4, 8, 8], strides = [1, 1, 1]} : vector<6x10x8xf32> to vector<4x8x8xf32>
    %31 = vector.extract_strided_slice %24 {offsets = [2, 0, 0], sizes = [4, 8, 8], strides = [1, 1, 1]} : vector<6x10x8xf32> to vector<4x8x8xf32>
    %32 = vector.extract_strided_slice %24 {offsets = [2, 1, 0], sizes = [4, 8, 8], strides = [1, 1, 1]} : vector<6x10x8xf32> to vector<4x8x8xf32>
    %33 = vector.extract_strided_slice %24 {offsets = [2, 2, 0], sizes = [4, 8, 8], strides = [1, 1, 1]} : vector<6x10x8xf32> to vector<4x8x8xf32>
    %34 = tpu.concatenate %25, %26, %27, %28, %29, %30, %31, %32, %33 in 2 : vector<4x8x8xf32>, vector<4x8x8xf32>, vector<4x8x8xf32>, vector<4x8x8xf32>, vector<4x8x8xf32>, vector<4x8x8xf32>, vector<4x8x8xf32>, vector<4x8x8xf32>, vector<4x8x8xf32> -> vector<4x8x72xf32>
    %35 = vector.shape_cast %34 : vector<4x8x72xf32> to vector<32x72xf32>
    %36 = arith.truncf %35 : vector<32x72xf32> to vector<32x72xbf16>
    %c0_17 = arith.constant 0 : index
    %c0_18 = arith.constant 0 : index
    %37 = vector.load %arg7[%c0_17, %c0_18] : memref<72x4xbf16, #tpu.memory_space<vmem>>, vector<72x4xbf16>
    %cst_19 = arith.constant dense<0.000000e+00> : vector<32x4xf32>
    %38 = tpu.matmul %36, %37, %cst_19 {dimension_numbers = #tpu.dot_dimension_numbers<[1], [0], [0], [1], [0, 0, 1, 1], [], []>} : vector<32x72xbf16>, vector<72x4xbf16>, vector<32x4xf32> -> vector<32x4xf32>
    %c0_20 = arith.constant 0 : index
    %c0_21 = arith.constant 0 : index
    %39 = vector.load %arg8[%c0_20, %c0_21] : memref<72x4xbf16, #tpu.memory_space<vmem>>, vector<72x4xbf16>
    %cst_22 = arith.constant dense<0.000000e+00> : vector<32x4xf32>
    %40 = tpu.matmul %36, %39, %cst_22 {dimension_numbers = #tpu.dot_dimension_numbers<[1], [0], [0], [1], [0, 0, 1, 1], [], []>} : vector<32x72xbf16>, vector<72x4xbf16>, vector<32x4xf32> -> vector<32x4xf32>
    %c0_23 = arith.constant 0 : index
    %c0_24 = arith.constant 0 : index
    %41 = vector.load %arg11[%c0_23, %c0_24] : memref<1x4xf32, #tpu.memory_space<vmem>>, vector<1x4xf32>
    %42 = vector.broadcast %41 : vector<1x4xf32> to vector<32x4xf32>
    %43 = arith.addf %40, %42 : vector<32x4xf32>
    %cst_25 = arith.constant 0.000000e+00 : f32
    %44 = vector.broadcast %cst_25 : f32 to vector<32x4xf32>
    %45 = arith.maximumf %43, %44 : vector<32x4xf32>
    %46 = vector.shape_cast %45 : vector<32x4xf32> to vector<1x4x8x4xf32>
    %c0_26 = arith.constant 0 : index
    %c0_27 = arith.constant 0 : index
    %c0_28 = arith.constant 0 : index
    %c0_29 = arith.constant 0 : index
    %47 = vector.load %arg13[%c0_26, %c0_27, %c0_28, %c0_29] : memref<1x4x8x4xf32, #tpu.memory_space<vmem>>, vector<1x4x8x4xf32>
    tpu.vector_store %arg13[%c0_26, %c0_27, %c0_28, %c0_29], %46 {strides = array<i32>} : memref<1x4x8x4xf32, #tpu.memory_space<vmem>>, vector<1x4x8x4xf32>,
    %c0_30 = arith.constant 0 : index
    %c0_31 = arith.constant 0 : index
    %48 = vector.load %arg9[%c0_30, %c0_31] : memref<128x32xf32, #tpu.memory_space<vmem>>, vector<128x32xf32>
    %cst_32 = arith.constant dense<0.000000e+00> : vector<128x4xf32>
    %49 = tpu.matmul %48, %38, %cst_32 {dimension_numbers = #tpu.dot_dimension_numbers<[1], [0], [0], [1], [0, 0, 1, 1], [], []>} : vector<128x32xf32>, vector<32x4xf32>, vector<128x4xf32> -> vector<128x4xf32>
    %50 = arith.addf %17, %49 : vector<128x4xf32>
    %c0_33 = arith.constant 0 : index
    %c0_34 = arith.constant 0 : index
    %51 = vector.load %arg10[%c0_33, %c0_34] : memref<1x4xf32, #tpu.memory_space<vmem>>, vector<1x4xf32>
    %52 = vector.broadcast %51 : vector<1x4xf32> to vector<128x4xf32>
    %53 = arith.addf %50, %52 : vector<128x4xf32>
    %cst_35 = arith.constant 0.000000e+00 : f32
    %54 = vector.broadcast %cst_35 : f32 to vector<128x4xf32>
    %55 = arith.maximumf %53, %54 : vector<128x4xf32>
    %56 = vector.shape_cast %55 : vector<128x4xf32> to vector<1x8x16x4xf32>
    %c0_36 = arith.constant 0 : index
    %c0_37 = arith.constant 0 : index
    %c0_38 = arith.constant 0 : index
    %c0_39 = arith.constant 0 : index
    %57 = vector.load %arg12[%c0_36, %c0_37, %c0_38, %c0_39] : memref<1x8x16x4xf32, #tpu.memory_space<vmem>>, vector<1x8x16x4xf32>
    tpu.vector_store %arg12[%c0_36, %c0_37, %c0_38, %c0_39], %56 {strides = array<i32>} : memref<1x8x16x4xf32, #tpu.memory_space<vmem>>, vector<1x8x16x4xf32>,
    return
  }
  func.func @transform_0(%arg0: i32, %arg1: i32) -> (i32, i32, i32, i32) {
    %c0_i32 = arith.constant 0 : i32
    %c0_i32_0 = arith.constant 0 : i32
    %c0_i32_1 = arith.constant 0 : i32
    return %arg0, %arg1, %c0_i32, %c0_i32_0 : i32, i32, i32, i32
  }
  func.func @transform_1(%arg0: i32, %arg1: i32) -> (i32, i32, i32, i32) {
    %c1_i32 = arith.constant 1 : i32
    %0 = arith.addi %arg1, %c1_i32 : i32
    %c4_i32 = arith.constant 4 : i32
    %1 = arith.muli %0, %c4_i32 : i32
    %c0_i32 = arith.constant 0 : i32
    %c0_i32_0 = arith.constant 0 : i32
    %c0_i32_1 = arith.constant 0 : i32
    return %arg0, %1, %c0_i32, %c0_i32_0 : i32, i32, i32, i32
  }
  func.func @transform_2(%arg0: i32, %arg1: i32) -> (i32, i32, i32, i32) {
    %c0_i32 = arith.constant 0 : i32
    %c0_i32_0 = arith.constant 0 : i32
    %c0_i32_1 = arith.constant 0 : i32
    return %arg0, %arg1, %c0_i32, %c0_i32_0 : i32, i32, i32, i32
  }
  func.func @transform_3(%arg0: i32, %arg1: i32) -> (i32, i32, i32, i32) {
    %c1_i32 = arith.constant 1 : i32
    %0 = arith.addi %arg1, %c1_i32 : i32
    %c2_i32 = arith.constant 2 : i32
    %1 = arith.muli %0, %c2_i32 : i32
    %c0_i32 = arith.constant 0 : i32
    %c0_i32_0 = arith.constant 0 : i32
    %c0_i32_1 = arith.constant 0 : i32
    return %arg0, %1, %c0_i32, %c0_i32_0 : i32, i32, i32, i32
  }
  func.func @transform_4(%arg0: i32, %arg1: i32) -> (i32, i32) {
    %c0_i32 = arith.constant 0 : i32
    %c0_i32_0 = arith.constant 0 : i32
    %c0_i32_1 = arith.constant 0 : i32
    return %c0_i32, %c0_i32_0 : i32, i32
  }
  func.func @transform_5(%arg0: i32, %arg1: i32) -> (i32, i32) {
    %c0_i32 = arith.constant 0 : i32
    %c0_i32_0 = arith.constant 0 : i32
    %c0_i32_1 = arith.constant 0 : i32
    return %c0_i32, %c0_i32_0 : i32, i32
  }
  func.func @transform_6(%arg0: i32, %arg1: i32) -> (i32, i32) {
    %c0_i32 = arith.constant 0 : i32
    %c0_i32_0 = arith.constant 0 : i32
    %c0_i32_1 = arith.constant 0 : i32
    return %c0_i32, %c0_i32_0 : i32, i32
  }
  func.func @transform_7(%arg0: i32, %arg1: i32) -> (i32, i32) {
    %c0_i32 = arith.constant 0 : i32
    %c0_i32_0 = arith.constant 0 : i32
    %c0_i32_1 = arith.constant 0 : i32
    return %c0_i32, %c0_i32_0 : i32, i32
  }
  func.func @transform_8(%arg0: i32, %arg1: i32) -> (i32, i32) {
    %c0_i32 = arith.constant 0 : i32
    %c0_i32_0 = arith.constant 0 : i32
    %c0_i32_1 = arith.constant 0 : i32
    return %c0_i32, %c0_i32_0 : i32, i32
  }
  func.func @transform_9(%arg0: i32, %arg1: i32) -> (i32, i32) {
    %c0_i32 = arith.constant 0 : i32
    %c0_i32_0 = arith.constant 0 : i32
    %c0_i32_1 = arith.constant 0 : i32
    return %c0_i32, %c0_i32_0 : i32, i32
  }
  func.func @transform_10(%arg0: i32, %arg1: i32) -> (i32, i32, i32, i32) {
    %c0_i32 = arith.constant 0 : i32
    %c0_i32_0 = arith.constant 0 : i32
    %c0_i32_1 = arith.constant 0 : i32
    return %arg0, %arg1, %c0_i32, %c0_i32_0 : i32, i32, i32, i32
  }
  func.func @transform_11(%arg0: i32, %arg1: i32) -> (i32, i32, i32, i32) {
    %c0_i32 = arith.constant 0 : i32
    %c0_i32_0 = arith.constant 0 : i32
    %c0_i32_1 = arith.constant 0 : i32
    return %arg0, %arg1, %c0_i32, %c0_i32_0 : i32, i32, i32, i32
  }
}

</mosaic_0001>

<llo_original>
// kernel: _lambda_.1
$region0: #{_lambda_.1}
  #allocation0 [shape = 'u32[]', space=smem, size = 0x4, offset = 0x4, fixed_abs, tag = 'smem constant byte address 0x4 - core index']
  #allocation1 [shape = 'u32[144,128]{1,0:T(1,128)}', space=vmem, size = 0x12000, scoped, tag = 'internal scratch']
  %s0 = inlined_call_operand.vmem [shape: bf16[2,18,18,4], index: 0, kind: input, shape index: {}, may-alias: {0,1}]
  %s1 = inlined_call_operand.vmem [shape: bf16[2,18,18,4], index: 1, kind: input, shape index: {}, may-alias: {0,1}]
  %s2 = inlined_call_operand.vmem [shape: bf16[2,10,10,8], index: 2, kind: input, shape index: {}, may-alias: {2,3}]
  %s3 = inlined_call_operand.vmem [shape: bf16[2,10,10,8], index: 3, kind: input, shape index: {}, may-alias: {2,3}]
  %s4 = inlined_call_operand.vmem [shape: bf16[36,4], index: 4, kind: input, shape index: {}]
  %s5 = inlined_call_operand.vmem [shape: bf16[72,4], index: 5, kind: input, shape index: {}]
  %s6 = inlined_call_operand.vmem [shape: bf16[72,4], index: 6, kind: input, shape index: {}]
  %s7 = inlined_call_operand.vmem [shape: f32[128,32], index: 7, kind: input, shape index: {}]
  %s8 = inlined_call_operand.vmem [shape: f32[1,4], index: 8, kind: input, shape index: {}]
  %s9 = inlined_call_operand.vmem [shape: f32[1,4], index: 9, kind: input, shape index: {}]
  %s10 = inlined_call_operand.vmem [shape: f32[2,16,16,4], index: 10, kind: output, shape index: {0}]
  %s11 = inlined_call_operand.vmem [shape: f32[2,8,8,4], index: 11, kind: output, shape index: {1}]
  %12 = xla_tuple %s10, %s11
  %s13 = sld [smem:[#allocation0]]
  $region81: #{_lambda_.1} parent=0
    _
  %s15 = ssub.s32 1, %s13
  %s16 = scalar_select 0, %s15, %s13
  loop: start=0, step=1, limit=6
  $region2: #{_lambda_.1} parent=0 // loop_pre_header
    _
  $region3: #{_lambda_.1} parent=0 // loop_header
    %s18 = sphi 0, %s22
    %p19 = scmp.ge.s32.totalorder %s18, 6
    %s25 = sphi 0, %s37
    %s26 = sphi 0, %s33
    %s27 = sphi 0, %s25
    %s28 = sphi 0, %s26
    %s29 = sphi 0, %s27
    %s30 = sphi 0, %s28
    %s42 = sphi 0, %s44
    %s45 = sphi 0, %s42
    %s46 = sphi 0, %s45
    %s62 = sphi 0, %s46
    %s74 = sphi 0, %s76
    %s77 = sphi 0, %s74
    %s78 = sphi 0, %s77
    %s94 = sphi 0, %s78
    %s102 = sphi 0, %s104
    %s105 = sphi 0, %s102
    %s106 = sphi 0, %s105
    %s122 = sphi 0, %s106
    %s134 = sphi 0, %s136
    %s137 = sphi 0, %s134
    %s138 = sphi 0, %s137
    %s154 = sphi 0, %s138
    %s158 = sphi 0, %s158
    %s160 = sphi 0, %s158
    %s161 = sphi 0, %s160
    %s175 = sphi 0, %s161
    %s179 = sphi 0, %s179
    %s181 = sphi 0, %s179
    %s182 = sphi 0, %s181
    %s196 = sphi 0, %s182
    %s200 = sphi 0, %s200
    %s202 = sphi 0, %s200
    %s203 = sphi 0, %s202
    %s217 = sphi 0, %s203
    %s221 = sphi 0, %s221
    %s223 = sphi 0, %s221
    %s224 = sphi 0, %s223
    %s238 = sphi 0, %s224
    %s242 = sphi 0, %s242
    %s244 = sphi 0, %s242
    %s245 = sphi 0, %s244
    %s259 = sphi 0, %s245
    %s263 = sphi 0, %s263
    %s265 = sphi 0, %s263
    %s266 = sphi 0, %s265
    %s280 = sphi 0, %s266
    %s288 = sphi 0, %s290
    %s291 = sphi 0, %s288
    %s292 = sphi 0, %s291
    %s308 = sphi 0, %s292
    %s316 = sphi 0, %s318
    %s319 = sphi 0, %s316
    %s320 = sphi 0, %s319
    %s336 = sphi 0, %s320
  $region4: #{_lambda_.1} parent=0 // loop_header_branch
    %21 = sbr.rel (%p19) target = $region8
  $region5: #{_lambda_.1} parent=0 // loop_body
    %s23 = ssub.s32 %s18, 1
    %s24 = ssub.s32 %s18, 2
    %s31 = sadd.s32 1, %s26
    %p32 = scmp.ge.s32.totalorder %s31, 2
    %s33 = scalar_select %p32, 0, %s31
    %s34 = sadd.s32 1, %s25
    %s35 = scalar_select %p32, %s34, %s25
    %p36 = scmp.ge.s32.totalorder %s35, 2
    %s37 = scalar_select %p36, 0, %s35
    %s38 = ssub.s32 %s25, %s37
    %s39 = ssub.s32 %s26, %s33
    %s40 = sor.u32 %s38, %s39
    %p41 = scmp.eq.s32.totalorder %s40, 0
    %s43 = sadd.s32 %s42, 1
    %s44 = scalar_select %p41, %s42, %s43
    %p47 = pneg %p41
    %p48 = scmp.eq.s32.totalorder %s18, 3
    %p49 = por %p47, %p48
    %p50 = scmp.ne.s32.totalorder %s42, %s45
    %p51 = scmp.eq.s32.totalorder %s18, 0
    %p52 = por %p50, %p51
    %p53 = scmp.ne.s32.totalorder %s42, %s45
    %p54 = scmp.eq.s32.totalorder %s23, 3
    %p55 = por %p53, %p54
    %p56 = scmp.ne.s32.totalorder %s45, %s46
    %p57 = scmp.eq.s32.totalorder %s23, 0
    %p58 = por %p56, %p57
    %p59 = scmp.ne.s32.totalorder %s45, %s46
    %p60 = scmp.eq.s32.totalorder %s24, 3
    %p61 = por %p59, %p60
    %p63 = scmp.ne.s32.totalorder %s46, %s62
    %p64 = scmp.eq.s32.totalorder %s24, 0
    %p65 = por %p63, %p64
    %s66 = sadd.s32 %s26, 1
    %s67 = smul.u32 %s66, 4
    %s68 = sadd.s32 %s33, 1
    %s69 = smul.u32 %s68, 4
    %s70 = ssub.s32 %s25, %s37
    %s71 = ssub.s32 %s67, %s69
    %s72 = sor.u32 %s70, %s71
    %p73 = scmp.eq.s32.totalorder %s72, 0
    %s75 = sadd.s32 %s74, 1
    %s76 = scalar_select %p73, %s74, %s75
    %p79 = pneg %p73
    %p80 = scmp.eq.s32.totalorder %s18, 3
    %p81 = por %p79, %p80
    %p82 = scmp.ne.s32.totalorder %s74, %s77
    %p83 = scmp.eq.s32.totalorder %s18, 0
    %p84 = por %p82, %p83
    %p85 = scmp.ne.s32.totalorder %s74, %s77
    %p86 = scmp.eq.s32.totalorder %s23, 3
    %p87 = por %p85, %p86
    %p88 = scmp.ne.s32.totalorder %s77, %s78
    %p89 = scmp.eq.s32.totalorder %s23, 0
    %p90 = por %p88, %p89
    %p91 = scmp.ne.s32.totalorder %s77, %s78
    %p92 = scmp.eq.s32.totalorder %s24, 3
    %p93 = por %p91, %p92
    %p95 = scmp.ne.s32.totalorder %s78, %s94
    %p96 = scmp.eq.s32.totalorder %s24, 0
    %p97 = por %p95, %p96
    %s98 = ssub.s32 %s25, %s37
    %s99 = ssub.s32 %s26, %s33
    %s100 = sor.u32 %s98, %s99
    %p101 = scmp.eq.s32.totalorder %s100, 0
    %s103 = sadd.s32 %s102, 1
    %s104 = scalar_select %p101, %s102, %s103
    %p107 = pneg %p101
    %p108 = scmp.eq.s32.totalorder %s18, 3
    %p109 = por %p107, %p108
    %p110 = scmp.ne.s32.totalorder %s102, %s105
    %p111 = scmp.eq.s32.totalorder %s18, 0
    %p112 = por %p110, %p111
    %p113 = scmp.ne.s32.totalorder %s102, %s105
    %p114 = scmp.eq.s32.totalorder %s23, 3
    %p115 = por %p113, %p114
    %p116 = scmp.ne.s32.totalorder %s105, %s106
    %p117 = scmp.eq.s32.totalorder %s23, 0
    %p118 = por %p116, %p117
    %p119 = scmp.ne.s32.totalorder %s105, %s106
    %p120 = scmp.eq.s32.totalorder %s24, 3
    %p121 = por %p119, %p120
    %p123 = scmp.ne.s32.totalorder %s106, %s122
    %p124 = scmp.eq.s32.totalorder %s24, 0
    %p125 = por %p123, %p124
    %s126 = sadd.s32 %s26, 1
    %s127 = smul.u32 %s126, 2
    %s128 = sadd.s32 %s33, 1
    %s129 = smul.u32 %s128, 2
    %s130 = ssub.s32 %s25, %s37
    %s131 = ssub.s32 %s127, %s129
    %s132 = sor.u32 %s130, %s131
    %p133 = scmp.eq.s32.totalorder %s132, 0
    %s135 = sadd.s32 %s134, 1
    %s136 = scalar_select %p133, %s134, %s135
    %p139 = pneg %p133
    %p140 = scmp.eq.s32.totalorder %s18, 3
    %p141 = por %p139, %p140
    %p142 = scmp.ne.s32.totalorder %s134, %s137
    %p143 = scmp.eq.s32.totalorder %s18, 0
    %p144 = por %p142, %p143
    %p145 = scmp.ne.s32.totalorder %s134, %s137
    %p146 = scmp.eq.s32.totalorder %s23, 3
    %p147 = por %p145, %p146
    %p148 = scmp.ne.s32.totalorder %s137, %s138
    %p149 = scmp.eq.s32.totalorder %s23, 0
    %p150 = por %p148, %p149
    %p151 = scmp.ne.s32.totalorder %s137, %s138
    %p152 = scmp.eq.s32.totalorder %s24, 3
    %p153 = por %p151, %p152
    %p155 = scmp.ne.s32.totalorder %s138, %s154
    %p156 = scmp.eq.s32.totalorder %s24, 0
    %p157 = por %p155, %p156
    %s159 = sadd.s32 %s158, 1
    %p162 = scmp.eq.s32.totalorder %s18, 3
    %p163 = scmp.ne.s32.totalorder %s158, %s160
    %p164 = scmp.eq.s32.totalorder %s18, 0
    %p165 = por %p163, %p164
    %p166 = scmp.ne.s32.totalorder %s158, %s160
    %p167 = scmp.eq.s32.totalorder %s23, 3
    %p168 = por %p166, %p167
    %p169 = scmp.ne.s32.totalorder %s160, %s161
    %p170 = scmp.eq.s32.totalorder %s23, 0
    %p171 = por %p169, %p170
    %p172 = scmp.ne.s32.totalorder %s160, %s161
    %p173 = scmp.eq.s32.totalorder %s24, 3
    %p174 = por %p172, %p173
    %p176 = scmp.ne.s32.totalorder %s161, %s175
    %p177 = scmp.eq.s32.totalorder %s24, 0
    %p178 = por %p176, %p177
    %s180 = sadd.s32 %s179, 1
    %p183 = scmp.eq.s32.totalorder %s18, 3
    %p184 = scmp.ne.s32.totalorder %s179, %s181
    %p185 = scmp.eq.s32.totalorder %s18, 0
    %p186 = por %p184, %p185
    %p187 = scmp.ne.s32.totalorder %s179, %s181
    %p188 = scmp.eq.s32.totalorder %s23, 3
    %p189 = por %p187, %p188
    %p190 = scmp.ne.s32.totalorder %s181, %s182
    %p191 = scmp.eq.s32.totalorder %s23, 0
    %p192 = por %p190, %p191
    %p193 = scmp.ne.s32.totalorder %s181, %s182
    %p194 = scmp.eq.s32.totalorder %s24, 3
    %p195 = por %p193, %p194
    %p197 = scmp.ne.s32.totalorder %s182, %s196
    %p198 = scmp.eq.s32.totalorder %s24, 0
    %p199 = por %p197, %p198
    %s201 = sadd.s32 %s200, 1
    %p204 = scmp.eq.s32.totalorder %s18, 3
    %p205 = scmp.ne.s32.totalorder %s200, %s202
    %p206 = scmp.eq.s32.totalorder %s18, 0
    %p207 = por %p205, %p206
    %p208 = scmp.ne.s32.totalorder %s200, %s202
    %p209 = scmp.eq.s32.totalorder %s23, 3
    %p210 = por %p208, %p209
    %p211 = scmp.ne.s32.totalorder %s202, %s203
    %p212 = scmp.eq.s32.totalorder %s23, 0
    %p213 = por %p211, %p212
    %p214 = scmp.ne.s32.totalorder %s202, %s203
    %p215 = scmp.eq.s32.totalorder %s24, 3
    %p216 = por %p214, %p215
    %p218 = scmp.ne.s32.totalorder %s203, %s217
    %p219 = scmp.eq.s32.totalorder %s24, 0
    %p220 = por %p218, %p219
    %s222 = sadd.s32 %s221, 1
    %p225 = scmp.eq.s32.totalorder %s18, 3
    %p226 = scmp.ne.s32.totalorder %s221, %s223
    %p227 = scmp.eq.s32.totalorder %s18, 0
    %p228 = por %p226, %p227
    %p229 = scmp.ne.s32.totalorder %s221, %s223
    %p230 = scmp.eq.s32.totalorder %s23, 3
    %p231 = por %p229, %p230
    %p232 = scmp.ne.s32.totalorder %s223, %s224
    %p233 = scmp.eq.s32.totalorder %s23, 0
    %p234 = por %p232, %p233
    %p235 = scmp.ne.s32.totalorder %s223, %s224
    %p236 = scmp.eq.s32.totalorder %s24, 3
    %p237 = por %p235, %p236
    %p239 = scmp.ne.s32.totalorder %s224, %s238
    %p240 = scmp.eq.s32.totalorder %s24, 0
    %p241 = por %p239, %p240
    %s243 = sadd.s32 %s242, 1
    %p246 = scmp.eq.s32.totalorder %s18, 3
    %p247 = scmp.ne.s32.totalorder %s242, %s244
    %p248 = scmp.eq.s32.totalorder %s18, 0
    %p249 = por %p247, %p248
    %p250 = scmp.ne.s32.totalorder %s242, %s244
    %p251 = scmp.eq.s32.totalorder %s23, 3
    %p252 = por %p250, %p251
    %p253 = scmp.ne.s32.totalorder %s244, %s245
    %p254 = scmp.eq.s32.totalorder %s23, 0
    %p255 = por %p253, %p254
    %p256 = scmp.ne.s32.totalorder %s244, %s245
    %p257 = scmp.eq.s32.totalorder %s24, 3
    %p258 = por %p256, %p257
    %p260 = scmp.ne.s32.totalorder %s245, %s259
    %p261 = scmp.eq.s32.totalorder %s24, 0
    %p262 = por %p260, %p261
    %s264 = sadd.s32 %s263, 1
    %p267 = scmp.eq.s32.totalorder %s18, 3
    %p268 = scmp.ne.s32.totalorder %s263, %s265
    %p269 = scmp.eq.s32.totalorder %s18, 0
    %p270 = por %p268, %p269
    %p271 = scmp.ne.s32.totalorder %s263, %s265
    %p272 = scmp.eq.s32.totalorder %s23, 3
    %p273 = por %p271, %p272
    %p274 = scmp.ne.s32.totalorder %s265, %s266
    %p275 = scmp.eq.s32.totalorder %s23, 0
    %p276 = por %p274, %p275
    %p277 = scmp.ne.s32.totalorder %s265, %s266
    %p278 = scmp.eq.s32.totalorder %s24, 3
    %p279 = por %p277, %p278
    %p281 = scmp.ne.s32.totalorder %s266, %s280
    %p282 = scmp.eq.s32.totalorder %s24, 0
    %p283 = por %p281, %p282
    %s284 = ssub.s32 %s25, %s37
    %s285 = ssub.s32 %s26, %s33
    %s286 = sor.u32 %s284, %s285
    %p287 = scmp.eq.s32.totalorder %s286, 0
    %s289 = sadd.s32 %s288, 1
    %s290 = scalar_select %p287, %s288, %s289
    %p293 = pneg %p287
    %p294 = scmp.eq.s32.totalorder %s18, 3
    %p295 = por %p293, %p294
    %p296 = scmp.ne.s32.totalorder %s288, %s291
    %p297 = scmp.eq.s32.totalorder %s18, 0
    %p298 = por %p296, %p297
    %p299 = scmp.ne.s32.totalorder %s288, %s291
    %p300 = scmp.eq.s32.totalorder %s23, 3
    %p301 = por %p299, %p300
    %p302 = scmp.ne.s32.totalorder %s291, %s292
    %p303 = scmp.eq.s32.totalorder %s23, 0
    %p304 = por %p302, %p303
    %p305 = scmp.ne.s32.totalorder %s291, %s292
    %p306 = scmp.eq.s32.totalorder %s24, 3
    %p307 = por %p305, %p306
    %p309 = scmp.ne.s32.totalorder %s292, %s308
    %p310 = scmp.eq.s32.totalorder %s24, 0
    %p311 = por %p309, %p310
    %s312 = ssub.s32 %s25, %s37
    %s313 = ssub.s32 %s26, %s33
    %s314 = sor.u32 %s312, %s313
    %p315 = scmp.eq.s32.totalorder %s314, 0
    %s317 = sadd.s32 %s316, 1
    %s318 = scalar_select %p315, %s316, %s317
    %p321 = pneg %p315
    %p322 = scmp.eq.s32.totalorder %s18, 3
    %p323 = por %p321, %p322
    %p324 = scmp.ne.s32.totalorder %s316, %s319
    %p325 = scmp.eq.s32.totalorder %s18, 0
    %p326 = por %p324, %p325
    %p327 = scmp.ne.s32.totalorder %s316, %s319
    %p328 = scmp.eq.s32.totalorder %s23, 3
    %p329 = por %p327, %p328
    %p330 = scmp.ne.s32.totalorder %s319, %s320
    %p331 = scmp.eq.s32.totalorder %s23, 0
    %p332 = por %p330, %p331
    %p333 = scmp.ne.s32.totalorder %s319, %s320
    %p334 = scmp.eq.s32.totalorder %s24, 3
    %p335 = por %p333, %p334
    %p337 = scmp.ne.s32.totalorder %s320, %s336
    %p338 = scmp.eq.s32.totalorder %s24, 0
    %p339 = por %p337, %p338
    %p340 = scmp.le.s32.totalorder 1, %s18
    %p341 = scmp.lt.s32.totalorder %s18, 5
    %p342 = pnand %p340, %p341
    %p343 = pneg %p342
    // Predicated region
    $region9: #{_lambda_.1} parent=5 // pred_check
      _
    $region10: #{_lambda_.1} parent=5 // pred_check_branch
      %345 = sbr.rel (%p342) target = $region12
    $region11: #{_lambda_.1} parent=5 // pred_region
      %s346 = ssub.s32 %s18, 1
      // Predicated region
      $region13: #{_lambda_.1} parent=11 // pred_check
        %p347 = pneg %p171
      $region14: #{_lambda_.1} parent=11 // pred_check_branch
        %349 = sbr.rel (%p347) target = $region16
      $region15: #{_lambda_.1} parent=11 // pred_region
        _
      $region16: #{_lambda_.1} parent=11 // pred_fallthru
        _
      // Predicated region
      $region17: #{_lambda_.1} parent=11 // pred_check
        %p350 = pneg %p192
      $region18: #{_lambda_.1} parent=11 // pred_check_branch
        %352 = sbr.rel (%p350) target = $region20
      $region19: #{_lambda_.1} parent=11 // pred_region
        _
      $region20: #{_lambda_.1} parent=11 // pred_fallthru
        _
      // Predicated region
      $region21: #{_lambda_.1} parent=11 // pred_check
        %p353 = pneg %p213
      $region22: #{_lambda_.1} parent=11 // pred_check_branch
        %355 = sbr.rel (%p353) target = $region24
      $region23: #{_lambda_.1} parent=11 // pred_region
        _
      $region24: #{_lambda_.1} parent=11 // pred_fallthru
        _
      // Predicated region
      $region25: #{_lambda_.1} parent=11 // pred_check
        %p356 = pneg %p234
      $region26: #{_lambda_.1} parent=11 // pred_check_branch
        %358 = sbr.rel (%p356) target = $region28
      $region27: #{_lambda_.1} parent=11 // pred_region
        _
      $region28: #{_lambda_.1} parent=11 // pred_fallthru
        _
      // Predicated region
      $region29: #{_lambda_.1} parent=11 // pred_check
        %p359 = pneg %p255
      $region30: #{_lambda_.1} parent=11 // pred_check_branch
        %361 = sbr.rel (%p359) target = $region32
      $region31: #{_lambda_.1} parent=11 // pred_region
        _
      $region32: #{_lambda_.1} parent=11 // pred_fallthru
        _
      // Predicated region
      $region33: #{_lambda_.1} parent=11 // pred_check
        %p362 = pneg %p276
      $region34: #{_lambda_.1} parent=11 // pred_check_branch
        %364 = sbr.rel (%p362) target = $region36
      $region35: #{_lambda_.1} parent=11 // pred_region
        _
      $region36: #{_lambda_.1} parent=11 // pred_fallthru
        _
    $region12: #{_lambda_.1} parent=5 // pred_fallthru
      _
    %p365 = scmp.lt.s32.totalorder %s18, 4
    // Predicated region
    $region37: #{_lambda_.1} parent=5 // pred_check
      %p366 = pneg %p365
    $region38: #{_lambda_.1} parent=5 // pred_check_branch
      %368 = sbr.rel (%p366) target = $region40
    $region39: #{_lambda_.1} parent=5 // pred_region
      // Predicated region
      $region41: #{_lambda_.1} parent=39 // pred_check
        %p369 = pneg %p52
      $region42: #{_lambda_.1} parent=39 // pred_check_branch
        %371 = sbr.rel (%p369) target = $region44
      $region43: #{_lambda_.1} parent=39 // pred_region
        %s372 = smul.u32 8, %s26
        %s373 = ssub.s32 18, %s372
        %p374 = scmp.lt.s32.totalorder %s373, 8
        %s375 = scalar_select %p374, %s373, 8
        %s376 = smul.u32 64, %s375
        %s377 = smul.u32 %s376, 3
        %p378 = scmp.lt.s32.totalorder %s25, 1
        %s379 = scalar_select %p378, %s25, 1
        %p380 = scmp.lt.s32.totalorder %s372, 17
        %s381 = scalar_select %p380, %s372, 17
        %s382 = smul.addr %s381, 3
        %s383 = smul.addr %s379, 54
        %s384 = sadd.s32 %s382, %s383
        %s385 = smul.addr %s384, 4
        %s386 = scalar_lea.vmem %s0, %s385
        %s387 = smul.u32 8, %s26
        %s388 = ssub.s32 18, %s387
        %p389 = scmp.lt.s32.totalorder %s388, 8
        %s390 = scalar_select %p389, %s388, 8
        %s391 = smul.u32 64, %s390
        %s392 = smul.u32 %s391, 3
      $region44: #{_lambda_.1} parent=39 // pred_fallthru
        _
      // Predicated region
      $region45: #{_lambda_.1} parent=39 // pred_check
        %p393 = pneg %p84
      $region46: #{_lambda_.1} parent=39 // pred_check_branch
        %395 = sbr.rel (%p393) target = $region48
      $region47: #{_lambda_.1} parent=39 // pred_region
        %s396 = sadd.s32 %s26, 1
        %s397 = smul.u32 %s396, 4
        %s398 = smul.u32 2, %s397
        %p399 = scmp.lt.s32.totalorder %s25, 1
        %s400 = scalar_select %p399, %s25, 1
        %p401 = scmp.lt.s32.totalorder %s398, 17
        %s402 = scalar_select %p401, %s398, 17
        %s403 = smul.addr %s402, 3
        %s404 = smul.addr %s400, 54
        %s405 = sadd.s32 %s403, %s404
        %s406 = smul.addr %s405, 4
        %s407 = scalar_lea.vmem %s1, %s406
        %s408 = sadd.s32 %s26, 1
        %s409 = smul.u32 %s408, 4
        %s410 = smul.u32 2, %s409
      $region48: #{_lambda_.1} parent=39 // pred_fallthru
        _
      // Predicated region
      $region49: #{_lambda_.1} parent=39 // pred_check
        %p411 = pneg %p112
      $region50: #{_lambda_.1} parent=39 // pred_check_branch
        %413 = sbr.rel (%p411) target = $region52
      $region51: #{_lambda_.1} parent=39 // pred_region
        %s414 = smul.u32 4, %s26
        %s415 = ssub.s32 10, %s414
        %p416 = scmp.lt.s32.totalorder %s415, 4
        %s417 = scalar_select %p416, %s415, 4
        %s418 = smul.u32 64, %s417
        %s419 = smul.u32 %s418, 2
        %p420 = scmp.lt.s32.totalorder %s25, 1
        %s421 = scalar_select %p420, %s25, 1
        %p422 = scmp.lt.s32.totalorder %s414, 9
        %s423 = scalar_select %p422, %s414, 9
        %s424 = smul.addr %s423, 2
        %s425 = smul.addr %s421, 20
        %s426 = sadd.s32 %s424, %s425
        %s427 = smul.addr %s426, 4
        %s428 = scalar_lea.vmem %s2, %s427
        %s429 = smul.u32 4, %s26
        %s430 = ssub.s32 10, %s429
        %p431 = scmp.lt.s32.totalorder %s430, 4
        %s432 = scalar_select %p431, %s430, 4
        %s433 = smul.u32 64, %s432
        %s434 = smul.u32 %s433, 2
      $region52: #{_lambda_.1} parent=39 // pred_fallthru
        _
      // Predicated region
      $region53: #{_lambda_.1} parent=39 // pred_check
        %p435 = pneg %p144
      $region54: #{_lambda_.1} parent=39 // pred_check_branch
        %437 = sbr.rel (%p435) target = $region56
      $region55: #{_lambda_.1} parent=39 // pred_region
        %s438 = sadd.s32 %s26, 1
        %s439 = smul.u32 %s438, 2
        %s440 = smul.u32 2, %s439
        %p441 = scmp.lt.s32.totalorder %s25, 1
        %s442 = scalar_select %p441, %s25, 1
        %p443 = scmp.lt.s32.totalorder %s440, 9
        %s444 = scalar_select %p443, %s440, 9
        %s445 = smul.addr %s444, 2
        %s446 = smul.addr %s442, 20
        %s447 = sadd.s32 %s445, %s446
        %s448 = smul.addr %s447, 4
        %s449 = scalar_lea.vmem %s3, %s448
        %s450 = sadd.s32 %s26, 1
        %s451 = smul.u32 %s450, 2
        %s452 = smul.u32 2, %s451
      $region56: #{_lambda_.1} parent=39 // pred_fallthru
        _
    $region40: #{_lambda_.1} parent=5 // pred_fallthru
      _
    %p453 = scmp.le.s32.totalorder 1, %s18
    %p454 = scmp.lt.s32.totalorder %s18, 5
    %p455 = pnand %p453, %p454
    %p456 = pneg %p455
    // Predicated region
    $region57: #{_lambda_.1} parent=5 // pred_check
      _
    $region58: #{_lambda_.1} parent=5 // pred_check_branch
      %458 = sbr.rel (%p455) target = $region60
    $region59: #{_lambda_.1} parent=5 // pred_region
      %s459 = ssub.s32 %s18, 1
      %s460 = smul.u32 8, %s28
      %s461 = ssub.s32 18, %s460
      %p462 = scmp.lt.s32.totalorder %s461, 8
      %s463 = scalar_select %p462, %s461, 8
      %s464 = smul.u32 64, %s463
      %s465 = smul.u32 %s464, 3
      %p466 = scmp.lt.s32.totalorder %s27, 1
      %s467 = scalar_select %p466, %s27, 1
      %p468 = scmp.lt.s32.totalorder %s460, 17
      %s469 = scalar_select %p468, %s460, 17
      %s470 = smul.addr %s469, 3
      %s471 = smul.addr %s467, 54
      %s472 = sadd.s32 %s470, %s471
      %s473 = smul.addr %s472, 4
      %s474 = scalar_lea.vmem %s0, %s473
      %p475 = pneg %p58
      %p476 = pneg %p55
      %s477 = sadd.s32 %s28, 1
      %s478 = smul.u32 %s477, 4
      %s479 = smul.u32 2, %s478
      %p480 = scmp.lt.s32.totalorder %s27, 1
      %s481 = scalar_select %p480, %s27, 1
      %p482 = scmp.lt.s32.totalorder %s479, 17
      %s483 = scalar_select %p482, %s479, 17
      %s484 = smul.addr %s483, 3
      %s485 = smul.addr %s481, 54
      %s486 = sadd.s32 %s484, %s485
      %s487 = smul.addr %s486, 4
      %s488 = scalar_lea.vmem %s1, %s487
      %p489 = pneg %p90
      %p490 = pneg %p87
      %s491 = smul.u32 4, %s28
      %s492 = ssub.s32 10, %s491
      %p493 = scmp.lt.s32.totalorder %s492, 4
      %s494 = scalar_select %p493, %s492, 4
      %s495 = smul.u32 64, %s494
      %s496 = smul.u32 %s495, 2
      %p497 = scmp.lt.s32.totalorder %s27, 1
      %s498 = scalar_select %p497, %s27, 1
      %p499 = scmp.lt.s32.totalorder %s491, 9
      %s500 = scalar_select %p499, %s491, 9
      %s501 = smul.addr %s500, 2
      %s502 = smul.addr %s498, 20
      %s503 = sadd.s32 %s501, %s502
      %s504 = smul.addr %s503, 4
      %s505 = scalar_lea.vmem %s2, %s504
      %p506 = pneg %p118
      %p507 = pneg %p115
      %s508 = sadd.s32 %s28, 1
      %s509 = smul.u32 %s508, 2
      %s510 = smul.u32 2, %s509
      %p511 = scmp.lt.s32.totalorder %s27, 1
      %s512 = scalar_select %p511, %s27, 1
      %p513 = scmp.lt.s32.totalorder %s510, 9
      %s514 = scalar_select %p513, %s510, 9
      %s515 = smul.addr %s514, 2
      %s516 = smul.addr %s512, 20
      %s517 = sadd.s32 %s515, %s516
      %s518 = smul.addr %s517, 4
      %s519 = scalar_lea.vmem %s3, %s518
      %p520 = pneg %p150
      %p521 = pneg %p147
      %p522 = pneg %p171
      %p523 = pneg %p168
      %p524 = pneg %p192
      %p525 = pneg %p189
      %p526 = pneg %p213
      %p527 = pneg %p210
      %p528 = pneg %p234
      %p529 = pneg %p231
      %p530 = pneg %p255
      %p531 = pneg %p252
      %p532 = pneg %p276
      %p533 = pneg %p273
      %p534 = pneg %p304
      %p535 = pneg %p301
      %s536 = smul.u32 8, %s28
      %p537 = scmp.lt.s32.totalorder %s27, 1
      %s538 = scalar_select %p537, %s27, 1
      %p539 = scmp.lt.s32.totalorder %s536, 15
      %s540 = scalar_select %p539, %s536, 15
      %s541 = smul.addr %s540, 2
      %s542 = smul.addr %s538, 32
      %s543 = sadd.s32 %s541, %s542
      %s544 = smul.addr %s543, 8
      %s545 = scalar_lea.vmem %s10, %s544
      %p546 = pneg %p332
      %p547 = pneg %p329
      %s548 = smul.u32 4, %s28
      %p549 = scmp.lt.s32.totalorder %s27, 1
      %s550 = scalar_select %p549, %s27, 1
      %p551 = scmp.lt.s32.totalorder %s548, 7
      %s552 = scalar_select %p551, %s548, 7
      %s553 = smul.addr %s550, 8
      %s554 = sadd.s32 %s552, %s553
      %s555 = smul.addr %s554, 8
      %s556 = scalar_lea.vmem %s11, %s555
      %s557 = smul.u32 8, %s28
      %s558 = ssub.s32 18, %s557
      %p559 = scmp.lt.s32.totalorder %s558, 8
      %s560 = scalar_select %p559, %s558, 8
      %s561 = smul.u32 64, %s560
      %s562 = smul.u32 %s561, 3
      %p563 = scmp.lt.s32.totalorder %s27, 1
      %s564 = scalar_select %p563, %s27, 1
      %p565 = scmp.lt.s32.totalorder %s557, 17
      %s566 = scalar_select %p565, %s557, 17
      %s567 = smul.addr %s566, 3
      %s568 = smul.addr %s564, 54
      %s569 = sadd.s32 %s567, %s568
      %s570 = smul.addr %s569, 4
      %s571 = scalar_lea.vmem %s0, %s570
      %s572 = smul.u32 8, %s28
      %s573 = ssub.s32 18, %s572
      %p574 = scmp.lt.s32.totalorder %s573, 8
      %s575 = scalar_select %p574, %s573, 8
      %s576 = smul.u32 64, %s575
      %s577 = smul.u32 %s576, 3
      %s578 = sadd.s32 %s28, 1
      %s579 = smul.u32 %s578, 4
      %s580 = smul.u32 2, %s579
      %p581 = scmp.lt.s32.totalorder %s27, 1
      %s582 = scalar_select %p581, %s27, 1
      %p583 = scmp.lt.s32.totalorder %s580, 17
      %s584 = scalar_select %p583, %s580, 17
      %s585 = smul.addr %s584, 3
      %s586 = smul.addr %s582, 54
      %s587 = sadd.s32 %s585, %s586
      %s588 = smul.addr %s587, 4
      %s589 = scalar_lea.vmem %s1, %s588
      %s590 = sadd.s32 %s28, 1
      %s591 = smul.u32 %s590, 4
      %s592 = smul.u32 2, %s591
      %s593 = smul.u32 4, %s28
      %s594 = ssub.s32 10, %s593
      %p595 = scmp.lt.s32.totalorder %s594, 4
      %s596 = scalar_select %p595, %s594, 4
      %s597 = smul.u32 64, %s596
      %s598 = smul.u32 %s597, 2
      %p599 = scmp.lt.s32.totalorder %s27, 1
      %s600 = scalar_select %p599, %s27, 1
      %p601 = scmp.lt.s32.totalorder %s593, 9
      %s602 = scalar_select %p601, %s593, 9
      %s603 = smul.addr %s602, 2
      %s604 = smul.addr %s600, 20
      %s605 = sadd.s32 %s603, %s604
      %s606 = smul.addr %s605, 4
      %s607 = scalar_lea.vmem %s2, %s606
      %s608 = smul.u32 4, %s28
      %s609 = ssub.s32 10, %s608
      %p610 = scmp.lt.s32.totalorder %s609, 4
      %s611 = scalar_select %p610, %s609, 4
      %s612 = smul.u32 64, %s611
      %s613 = smul.u32 %s612, 2
      %s614 = sadd.s32 %s28, 1
      %s615 = smul.u32 %s614, 2
      %s616 = smul.u32 2, %s615
      %p617 = scmp.lt.s32.totalorder %s27, 1
      %s618 = scalar_select %p617, %s27, 1
      %p619 = scmp.lt.s32.totalorder %s616, 9
      %s620 = scalar_select %p619, %s616, 9
      %s621 = smul.addr %s620, 2
      %s622 = smul.addr %s618, 20
      %s623 = sadd.s32 %s621, %s622
      %s624 = smul.addr %s623, 4
      %s625 = scalar_lea.vmem %s3, %s624
      %s626 = sadd.s32 %s28, 1
      %s627 = smul.u32 %s626, 2
      %s628 = smul.u32 2, %s627
      %s629 = smul.u32 8, %s28
      %p630 = scmp.lt.s32.totalorder %s27, 1
      %s631 = scalar_select %p630, %s27, 1
      %p632 = scmp.lt.s32.totalorder %s629, 15
      %s633 = scalar_select %p632, %s629, 15
      %s634 = smul.addr %s633, 2
      %s635 = smul.addr %s631, 32
      %s636 = sadd.s32 %s634, %s635
      %s637 = smul.addr %s636, 8
      %s638 = scalar_lea.vmem %s10, %s637
      %s639 = smul.u32 8, %s28
      %s640 = smul.u32 4, %s28
      %p641 = scmp.lt.s32.totalorder %s27, 1
      %s642 = scalar_select %p641, %s27, 1
      %p643 = scmp.lt.s32.totalorder %s640, 7
      %s644 = scalar_select %p643, %s640, 7
      %s645 = smul.addr %s642, 8
      %s646 = sadd.s32 %s644, %s645
      %s647 = smul.addr %s646, 8
      %s648 = scalar_lea.vmem %s11, %s647
      %s649 = smul.u32 4, %s28
      %v651 = vld [vmem:[%s571] sm:$0xf]
      %v652 = vld [vmem:[%s571 + $0x4] sm:$0xf]
      %v653 = vld [vmem:[%s571 + $0x8] sm:$0x1]
      %v654 = vld [vmem:[%s571 + $0xc] sm:$0xf]
      %v655 = vld [vmem:[%s571 + $0x10] sm:$0xf]
      %v656 = vld [vmem:[%s571 + $0x14] sm:$0x1]
      %v657 = vld [vmem:[%s571 + $0x18] sm:$0xf]
      %v658 = vld [vmem:[%s571 + $0x1c] sm:$0xf]
      %v659 = vld [vmem:[%s571 + $0x20] sm:$0x1]
      %v660 = vld [vmem:[%s571 + $0x24] sm:$0xf]
      %v661 = vld [vmem:[%s571 + $0x28] sm:$0xf]
      %v662 = vld [vmem:[%s571 + $0x2c] sm:$0x1]
      %v663 = vld [vmem:[%s571 + $0x30] sm:$0xf]
      %v664 = vld [vmem:[%s571 + $0x34] sm:$0xf]
      %v665 = vld [vmem:[%s571 + $0x38] sm:$0x1]
      %v666 = vld [vmem:[%s571 + $0x3c] sm:$0xf]
      %v667 = vld [vmem:[%s571 + $0x40] sm:$0xf]
      %v668 = vld [vmem:[%s571 + $0x44] sm:$0x1]
      %v669 = vld [vmem:[%s571 + $0x48] sm:$0xf]
      %v670 = vld [vmem:[%s571 + $0x4c] sm:$0xf]
      %v671 = vld [vmem:[%s571 + $0x50] sm:$0x1]
      %v672 = vld [vmem:[%s571 + $0x54] sm:$0xf]
      %v673 = vld [vmem:[%s571 + $0x58] sm:$0xf]
      %v674 = vld [vmem:[%s571 + $0x5c] sm:$0x1]
      %v675 = vld [vmem:[%s589] sm:$0xf]
      %v676 = vld [vmem:[%s589 + $0x4] sm:$0xf]
      %v677 = vld [vmem:[%s589 + $0x8] sm:$0x1]
      %v678 = vld [vmem:[%s589 + $0xc] sm:$0xf]
      %v679 = vld [vmem:[%s589 + $0x10] sm:$0xf]
      %v680 = vld [vmem:[%s589 + $0x14] sm:$0x1]
      %v697 = vunpack.c.l.b16 %v651
      %v698 = vunpack.c.l.b16 %v652
      %v699 = vunpack.c.l.b16 %v654
      %v700 = vunpack.c.l.b16 %v655
      %v701 = vunpack.c.l.b16 %v657
      %v702 = vunpack.c.l.b16 %v658
      %v703 = vunpack.c.l.b16 %v660
      %v704 = vunpack.c.l.b16 %v661
      %v705 = vunpack.c.l.b16 %v663
      %v706 = vunpack.c.l.b16 %v664
      %v707 = vunpack.c.l.b16 %v666
      %v708 = vunpack.c.l.b16 %v667
      %v709 = vunpack.c.l.b16 %v669
      %v710 = vunpack.c.l.b16 %v670
      %v711 = vunpack.c.l.b16 %v672
      %v712 = vunpack.c.l.b16 %v673
      %v713 = vpack.c.b16 %v698, %v697
      %v714 = vpack.c.b16 %v700, %v699
      %v715 = vpack.c.b16 %v702, %v701
      %v716 = vpack.c.b16 %v704, %v703
      %v717 = vpack.c.b16 %v706, %v705
      %v718 = vpack.c.b16 %v708, %v707
      %v719 = vpack.c.b16 %v710, %v709
      %v720 = vpack.c.b16 %v712, %v711
      %v729 = vunpack.c.l.b16 %v653
      %v730 = vunpack.c.l.b16 %v656
      %v731 = vunpack.c.l.b16 %v659
      %v732 = vunpack.c.l.b16 %v662
      %v733 = vunpack.c.l.b16 %v665
      %v734 = vunpack.c.l.b16 %v668
      %v735 = vunpack.c.l.b16 %v671
      %v736 = vunpack.c.l.b16 %v674
      %v737 = vpack.c.b16 %v729, %v729
      %v738 = vpack.c.b16 %v730, %v730
      %v739 = vpack.c.b16 %v731, %v731
      %v740 = vpack.c.b16 %v732, %v732
      %v741 = vpack.c.b16 %v733, %v733
      %v742 = vpack.c.b16 %v734, %v734
      %v743 = vpack.c.b16 %v735, %v735
      %v744 = vpack.c.b16 %v736, %v736
      %vm745 = vsmask.f32 7424
      %v747 = vshrl.u32 %v713, 16
      %v749 = vshll.u32 %v713, 16
      %v751 = vrot.slane %v749, 1
      %v752 = vor.u32 %v747, %v751
      %v754 = vshll.u32 %v737, 16
      %v756 = vrot.slane %v754, 1
      %v757 = vsel %vm745, %v752, %v756
      %v759 = vshrl.u32 %v714, 16
      %v761 = vshll.u32 %v714, 16
      %v763 = vrot.slane %v761, 1
      %v764 = vor.u32 %v759, %v763
      %v766 = vshll.u32 %v738, 16
      %v768 = vrot.slane %v766, 1
      %v769 = vsel %vm745, %v764, %v768
      %v771 = vshrl.u32 %v715, 16
      %v773 = vshll.u32 %v715, 16
      %v775 = vrot.slane %v773, 1
      %v776 = vor.u32 %v771, %v775
      %v778 = vshll.u32 %v739, 16
      %v780 = vrot.slane %v778, 1
      %v781 = vsel %vm745, %v776, %v780
      %v783 = vshrl.u32 %v716, 16
      %v785 = vshll.u32 %v716, 16
      %v787 = vrot.slane %v785, 1
      %v788 = vor.u32 %v783, %v787
      %v790 = vshll.u32 %v740, 16
      %v792 = vrot.slane %v790, 1
      %v793 = vsel %vm745, %v788, %v792
      %v795 = vshrl.u32 %v717, 16
      %v797 = vshll.u32 %v717, 16
      %v799 = vrot.slane %v797, 1
      %v800 = vor.u32 %v795, %v799
      %v802 = vshll.u32 %v741, 16
      %v804 = vrot.slane %v802, 1
      %v805 = vsel %vm745, %v800, %v804
      %v807 = vshrl.u32 %v718, 16
      %v809 = vshll.u32 %v718, 16
      %v811 = vrot.slane %v809, 1
      %v812 = vor.u32 %v807, %v811
      %v814 = vshll.u32 %v742, 16
      %v816 = vrot.slane %v814, 1
      %v817 = vsel %vm745, %v812, %v816
      %v819 = vshrl.u32 %v719, 16
      %v821 = vshll.u32 %v719, 16
      %v823 = vrot.slane %v821, 1
      %v824 = vor.u32 %v819, %v823
      %v826 = vshll.u32 %v743, 16
      %v828 = vrot.slane %v826, 1
      %v829 = vsel %vm745, %v824, %v828
      %v831 = vshrl.u32 %v720, 16
      %v833 = vshll.u32 %v720, 16
      %v835 = vrot.slane %v833, 1
      %v836 = vor.u32 %v831, %v835
      %v838 = vshll.u32 %v744, 16
      %v840 = vrot.slane %v838, 1
      %v841 = vsel %vm745, %v836, %v840
      %842 = vrot.lane.b32.xlu0 %v757, 4
      %v843 = vpop.permute.xlu0 %842
      %844 = vrot.lane.b32.xlu0 %v769, 4
      %v845 = vpop.permute.xlu0 %844
      %846 = vrot.lane.b32.xlu0 %v781, 4
      %v847 = vpop.permute.xlu0 %846
      %848 = vrot.lane.b32.xlu0 %v793, 4
      %v849 = vpop.permute.xlu0 %848
      %850 = vrot.lane.b32.xlu0 %v805, 4
      %v851 = vpop.permute.xlu0 %850
      %852 = vrot.lane.b32.xlu0 %v817, 4
      %v853 = vpop.permute.xlu0 %852
      %854 = vrot.lane.b32.xlu0 %v829, 4
      %v855 = vpop.permute.xlu0 %854
      %856 = vrot.lane.b32.xlu0 %v841, 4
      %v857 = vpop.permute.xlu0 %856
      %vm858 = vcmask 1046528
      %v859 = vrot.slane %v713, 1
      %v860 = vrot.slane %v737, 1
      %v861 = vsel %vm858, %v859, %v860
      %v862 = vrot.slane %v714, 1
      %v863 = vrot.slane %v738, 1
      %v864 = vsel %vm858, %v862, %v863
      %v865 = vrot.slane %v715, 1
      %v866 = vrot.slane %v739, 1
      %v867 = vsel %vm858, %v865, %v866
      %v868 = vrot.slane %v716, 1
      %v869 = vrot.slane %v740, 1
      %v870 = vsel %vm858, %v868, %v869
      %v871 = vrot.slane %v717, 1
      %v872 = vrot.slane %v741, 1
      %v873 = vsel %vm858, %v871, %v872
      %v874 = vrot.slane %v718, 1
      %v875 = vrot.slane %v742, 1
      %v876 = vsel %vm858, %v874, %v875
      %v877 = vrot.slane %v719, 1
      %v878 = vrot.slane %v743, 1
      %v879 = vsel %vm858, %v877, %v878
      %v880 = vrot.slane %v720, 1
      %v881 = vrot.slane %v744, 1
      %v882 = vsel %vm858, %v880, %v881
      %883 = vrot.lane.b32.xlu0 %v861, 8
      %v884 = vpop.permute.xlu0 %883
      %885 = vrot.lane.b32.xlu0 %v864, 8
      %v886 = vpop.permute.xlu0 %885
      %887 = vrot.lane.b32.xlu0 %v867, 8
      %v888 = vpop.permute.xlu0 %887
      %889 = vrot.lane.b32.xlu0 %v870, 8
      %v890 = vpop.permute.xlu0 %889
      %891 = vrot.lane.b32.xlu0 %v873, 8
      %v892 = vpop.permute.xlu0 %891
      %893 = vrot.lane.b32.xlu0 %v876, 8
      %v894 = vpop.permute.xlu0 %893
      %895 = vrot.lane.b32.xlu0 %v879, 8
      %v896 = vpop.permute.xlu0 %895
      %897 = vrot.lane.b32.xlu0 %v882, 8
      %v898 = vpop.permute.xlu0 %897
      %v901 = vunpack.c.l.b16 %v675
      %v902 = vunpack.c.l.b16 %v676
      %v903 = vpack.c.b16 %v902, %v901
      %904 = vrot.lane.b32.xlu0 %v714, 12
      %v905 = vpop.permute.xlu0 %904
      %906 = vrot.lane.b32.xlu0 %v715, 12
      %v907 = vpop.permute.xlu0 %906
      %908 = vrot.lane.b32.xlu0 %v716, 12
      %v909 = vpop.permute.xlu0 %908
      %910 = vrot.lane.b32.xlu0 %v717, 12
      %v911 = vpop.permute.xlu0 %910
      %912 = vrot.lane.b32.xlu0 %v718, 12
      %v913 = vpop.permute.xlu0 %912
      %914 = vrot.lane.b32.xlu0 %v719, 12
      %v915 = vpop.permute.xlu0 %914
      %916 = vrot.lane.b32.xlu0 %v720, 12
      %v917 = vpop.permute.xlu0 %916
      %918 = vrot.lane.b32.xlu0 %v903, 12
      %v919 = vpop.permute.xlu0 %918
      %v921 = vunpack.c.l.b16 %v677
      %v922 = vpack.c.b16 %v921, %v921
      %v924 = vshrl.u32 %v903, 16
      %v926 = vshll.u32 %v903, 16
      %v928 = vrot.slane %v926, 1
      %v929 = vor.u32 %v924, %v928
      %v931 = vshll.u32 %v922, 16
      %v933 = vrot.slane %v931, 1
      %v934 = vsel %vm745, %v929, %v933
      %935 = vrot.lane.b32.xlu0 %v769, 16
      %v936 = vpop.permute.xlu0 %935
      %937 = vrot.lane.b32.xlu0 %v781, 16
      %v938 = vpop.permute.xlu0 %937
      %939 = vrot.lane.b32.xlu0 %v793, 16
      %v940 = vpop.permute.xlu0 %939
      %941 = vrot.lane.b32.xlu0 %v805, 16
      %v942 = vpop.permute.xlu0 %941
      %943 = vrot.lane.b32.xlu0 %v817, 16
      %v944 = vpop.permute.xlu0 %943
      %945 = vrot.lane.b32.xlu0 %v829, 16
      %v946 = vpop.permute.xlu0 %945
      %947 = vrot.lane.b32.xlu0 %v841, 16
      %v948 = vpop.permute.xlu0 %947
      %949 = vrot.lane.b32.xlu0 %v934, 16
      %v950 = vpop.permute.xlu0 %949
      %v951 = vrot.slane %v903, 1
      %v952 = vrot.slane %v922, 1
      %v953 = vsel %vm858, %v951, %v952
      %954 = vrot.lane.b32.xlu0 %v864, 20
      %v955 = vpop.permute.xlu0 %954
      %956 = vrot.lane.b32.xlu0 %v867, 20
      %v957 = vpop.permute.xlu0 %956
      %958 = vrot.lane.b32.xlu0 %v870, 20
      %v959 = vpop.permute.xlu0 %958
      %960 = vrot.lane.b32.xlu0 %v873, 20
      %v961 = vpop.permute.xlu0 %960
      %962 = vrot.lane.b32.xlu0 %v876, 20
      %v963 = vpop.permute.xlu0 %962
      %964 = vrot.lane.b32.xlu0 %v879, 20
      %v965 = vpop.permute.xlu0 %964
      %966 = vrot.lane.b32.xlu0 %v882, 20
      %v967 = vpop.permute.xlu0 %966
      %968 = vrot.lane.b32.xlu0 %v953, 20
      %v969 = vpop.permute.xlu0 %968
      %v972 = vunpack.c.l.b16 %v678
      %v973 = vunpack.c.l.b16 %v679
      %v974 = vpack.c.b16 %v973, %v972
      %975 = vrot.lane.b32.xlu0 %v715, 24
      %v976 = vpop.permute.xlu0 %975
      %977 = vrot.lane.b32.xlu0 %v716, 24
      %v978 = vpop.permute.xlu0 %977
      %979 = vrot.lane.b32.xlu0 %v717, 24
      %v980 = vpop.permute.xlu0 %979
      %981 = vrot.lane.b32.xlu0 %v718, 24
      %v982 = vpop.permute.xlu0 %981
      %983 = vrot.lane.b32.xlu0 %v719, 24
      %v984 = vpop.permute.xlu0 %983
      %985 = vrot.lane.b32.xlu0 %v720, 24
      %v986 = vpop.permute.xlu0 %985
      %987 = vrot.lane.b32.xlu0 %v903, 24
      %v988 = vpop.permute.xlu0 %987
      %989 = vrot.lane.b32.xlu0 %v974, 24
      %v990 = vpop.permute.xlu0 %989
      %v992 = vunpack.c.l.b16 %v680
      %v993 = vpack.c.b16 %v992, %v992
      %v995 = vshrl.u32 %v974, 16
      %v997 = vshll.u32 %v974, 16
      %v999 = vrot.slane %v997, 1
      %v1000 = vor.u32 %v995, %v999
      %v1002 = vshll.u32 %v993, 16
      %v1004 = vrot.slane %v1002, 1
      %v1005 = vsel %vm745, %v1000, %v1004
      %1006 = vrot.lane.b32.xlu0 %v781, 28
      %v1007 = vpop.permute.xlu0 %1006
      %1008 = vrot.lane.b32.xlu0 %v793, 28
      %v1009 = vpop.permute.xlu0 %1008
      %1010 = vrot.lane.b32.xlu0 %v805, 28
      %v1011 = vpop.permute.xlu0 %1010
      %1012 = vrot.lane.b32.xlu0 %v817, 28
      %v1013 = vpop.permute.xlu0 %1012
      %1014 = vrot.lane.b32.xlu0 %v829, 28
      %v1015 = vpop.permute.xlu0 %1014
      %1016 = vrot.lane.b32.xlu0 %v841, 28
      %v1017 = vpop.permute.xlu0 %1016
      %1018 = vrot.lane.b32.xlu0 %v934, 28
      %v1019 = vpop.permute.xlu0 %1018
      %1020 = vrot.lane.b32.xlu0 %v1005, 28
      %v1021 = vpop.permute.xlu0 %1020
      %v1022 = vrot.slane %v974, 1
      %v1023 = vrot.slane %v993, 1
      %v1024 = vsel %vm858, %v1022, %v1023
      %1025 = vrot.lane.b32.xlu0 %v867, 32
      %v1026 = vpop.permute.xlu0 %1025
      %1027 = vrot.lane.b32.xlu0 %v870, 32
      %v1028 = vpop.permute.xlu0 %1027
      %1029 = vrot.lane.b32.xlu0 %v873, 32
      %v1030 = vpop.permute.xlu0 %1029
      %1031 = vrot.lane.b32.xlu0 %v876, 32
      %v1032 = vpop.permute.xlu0 %1031
      %1033 = vrot.lane.b32.xlu0 %v879, 32
      %v1034 = vpop.permute.xlu0 %1033
      %1035 = vrot.lane.b32.xlu0 %v882, 32
      %v1036 = vpop.permute.xlu0 %1035
      %1037 = vrot.lane.b32.xlu0 %v953, 32
      %v1038 = vpop.permute.xlu0 %1037
      %1039 = vrot.lane.b32.xlu0 %v1024, 32
      %v1040 = vpop.permute.xlu0 %1039
      %vm1041 = vcmask 31744
      %v1043 = vsel %vm1041, %v713, %v843
      %v1045 = vsel %vm1041, %v714, %v845
      %v1047 = vsel %vm1041, %v715, %v847
      %v1049 = vsel %vm1041, %v716, %v849
      %v1051 = vsel %vm1041, %v717, %v851
      %v1053 = vsel %vm1041, %v718, %v853
      %v1055 = vsel %vm1041, %v719, %v855
      %v1057 = vsel %vm1041, %v720, %v857
      %vm1058 = vcmask 64512
      %v1060 = vsel %vm1058, %v1043, %v884
      %v1062 = vsel %vm1058, %v1045, %v886
      %v1064 = vsel %vm1058, %v1047, %v888
      %v1066 = vsel %vm1058, %v1049, %v890
      %v1068 = vsel %vm1058, %v1051, %v892
      %v1070 = vsel %vm1058, %v1053, %v894
      %v1072 = vsel %vm1058, %v1055, %v896
      %v1074 = vsel %vm1058, %v1057, %v898
      %vm1075 = vcmask 97280
      %v1077 = vsel %vm1075, %v1060, %v905
      %v1079 = vsel %vm1075, %v1062, %v907
      %v1081 = vsel %vm1075, %v1064, %v909
      %v1083 = vsel %vm1075, %v1066, %v911
      %v1085 = vsel %vm1075, %v1068, %v913
      %v1087 = vsel %vm1075, %v1070, %v915
      %v1089 = vsel %vm1075, %v1072, %v917
      %v1091 = vsel %vm1075, %v1074, %v919
      %vm1092 = vcmask 130048
      %v1094 = vsel %vm1092, %v1077, %v936
      %v1096 = vsel %vm1092, %v1079, %v938
      %v1098 = vsel %vm1092, %v1081, %v940
      %v1100 = vsel %vm1092, %v1083, %v942
      %v1102 = vsel %vm1092, %v1085, %v944
      %v1104 = vsel %vm1092, %v1087, %v946
      %v1106 = vsel %vm1092, %v1089, %v948
      %v1108 = vsel %vm1092, %v1091, %v950
      %vm1109 = vcmask 162816
      %v1111 = vsel %vm1109, %v1094, %v955
      %v1113 = vsel %vm1109, %v1096, %v957
      %v1115 = vsel %vm1109, %v1098, %v959
      %v1117 = vsel %vm1109, %v1100, %v961
      %v1119 = vsel %vm1109, %v1102, %v963
      %v1121 = vsel %vm1109, %v1104, %v965
      %v1123 = vsel %vm1109, %v1106, %v967
      %v1125 = vsel %vm1109, %v1108, %v969
      %vm1126 = vcmask 195584
      %v1128 = vsel %vm1126, %v1111, %v976
      %v1130 = vsel %vm1126, %v1113, %v978
      %v1132 = vsel %vm1126, %v1115, %v980
      %v1134 = vsel %vm1126, %v1117, %v982
      %v1136 = vsel %vm1126, %v1119, %v984
      %v1138 = vsel %vm1126, %v1121, %v986
      %v1140 = vsel %vm1126, %v1123, %v988
      %v1142 = vsel %vm1126, %v1125, %v990
      %vm1143 = vcmask 228352
      %v1145 = vsel %vm1143, %v1128, %v1007
      %v1147 = vsel %vm1143, %v1130, %v1009
      %v1149 = vsel %vm1143, %v1132, %v1011
      %v1151 = vsel %vm1143, %v1134, %v1013
      %v1153 = vsel %vm1143, %v1136, %v1015
      %v1155 = vsel %vm1143, %v1138, %v1017
      %v1157 = vsel %vm1143, %v1140, %v1019
      %v1159 = vsel %vm1143, %v1142, %v1021
      %vm1160 = vcmask 261120
      %v1162 = vsel %vm1160, %v1145, %v1026
      %v1164 = vsel %vm1160, %v1147, %v1028
      %v1166 = vsel %vm1160, %v1149, %v1030
      %v1168 = vsel %vm1160, %v1151, %v1032
      %v1170 = vsel %vm1160, %v1153, %v1034
      %v1172 = vsel %vm1160, %v1155, %v1036
      %v1174 = vsel %vm1160, %v1157, %v1038
      %v1176 = vsel %vm1160, %v1159, %v1040
      %v1177 = vld [vmem:[%s4] sm:$0xf]
      %v1178 = vld [vmem:[%s4 + $0x4] sm:$0xf]
      %v1179 = vld [vmem:[%s4 + $0x8] sm:$0xf]
      %v1180 = vld [vmem:[%s4 + $0xc] sm:$0xf]
      %v1181 = vld [vmem:[%s4 + $0x10] sm:$0x3]
      %v1182 = vld [vmem:[%s607] sm:$0xf]
      %v1183 = vld [vmem:[%s607 + $0x4] sm:$0x1]
      %v1184 = vld [vmem:[%s607 + $0x8] sm:$0xf]
      %v1185 = vld [vmem:[%s607 + $0xc] sm:$0x1]
      %v1186 = vld [vmem:[%s607 + $0x10] sm:$0xf]
      %v1187 = vld [vmem:[%s607 + $0x14] sm:$0x1]
      %v1188 = vld [vmem:[%s607 + $0x18] sm:$0xf]
      %v1189 = vld [vmem:[%s607 + $0x1c] sm:$0x1]
      %v1190 = vunpack.c.l.bf16 %v1182
      %v1191 = vunpack.c.l.bf16 %v1183
      %v1192 = vunpack.c.l.bf16 %v1184
      %v1193 = vunpack.c.l.bf16 %v1185
      %v1194 = vunpack.c.l.bf16 %v1186
      %v1195 = vunpack.c.l.bf16 %v1187
      %v1196 = vunpack.c.l.bf16 %v1188
      %v1197 = vunpack.c.l.bf16 %v1189
      %v1198 = vld [vmem:[%s625] sm:$0xf]
      %v1199 = vld [vmem:[%s625 + $0x4] sm:$0x1]
      %v1200 = vld [vmem:[%s625 + $0x8] sm:$0xf]
      %v1201 = vld [vmem:[%s625 + $0xc] sm:$0x1]
      %v1202 = vunpack.c.l.bf16 %v1198
      %v1203 = vunpack.c.l.bf16 %v1199
      %v1204 = vunpack.c.l.bf16 %v1200
      %v1205 = vunpack.c.l.bf16 %v1201
      %vm1214 = vcmask 1046528
      %v1215 = vrot.slane %v1190, 1
      %v1216 = vrot.slane %v1191, 1
      %v1217 = vsel %vm1214, %v1215, %v1216
      %v1218 = vrot.slane %v1192, 1
      %v1219 = vrot.slane %v1193, 1
      %v1220 = vsel %vm1214, %v1218, %v1219
      %v1221 = vrot.slane %v1194, 1
      %v1222 = vrot.slane %v1195, 1
      %v1223 = vsel %vm1214, %v1221, %v1222
      %v1224 = vrot.slane %v1196, 1
      %v1225 = vrot.slane %v1197, 1
      %v1226 = vsel %vm1214, %v1224, %v1225
      %1227 = vrot.lane.b32.xlu0 %v1217, 8
      %v1228 = vpop.permute.xlu0 %1227
      %1229 = vrot.lane.b32.xlu0 %v1220, 8
      %v1230 = vpop.permute.xlu0 %1229
      %1231 = vrot.lane.b32.xlu0 %v1223, 8
      %v1232 = vpop.permute.xlu0 %1231
      %1233 = vrot.lane.b32.xlu0 %v1226, 8
      %v1234 = vpop.permute.xlu0 %1233
      %vm1239 = vcmask 1045504
      %v1240 = vrot.slane %v1190, 2
      %v1241 = vrot.slane %v1191, 2
      %v1242 = vsel %vm1239, %v1240, %v1241
      %v1243 = vrot.slane %v1192, 2
      %v1244 = vrot.slane %v1193, 2
      %v1245 = vsel %vm1239, %v1243, %v1244
      %v1246 = vrot.slane %v1194, 2
      %v1247 = vrot.slane %v1195, 2
      %v1248 = vsel %vm1239, %v1246, %v1247
      %v1249 = vrot.slane %v1196, 2
      %v1250 = vrot.slane %v1197, 2
      %v1251 = vsel %vm1239, %v1249, %v1250
      %1252 = vrot.lane.b32.xlu0 %v1242, 16
      %v1253 = vpop.permute.xlu0 %1252
      %1254 = vrot.lane.b32.xlu0 %v1245, 16
      %v1255 = vpop.permute.xlu0 %1254
      %1256 = vrot.lane.b32.xlu0 %v1248, 16
      %v1257 = vpop.permute.xlu0 %1256
      %1258 = vrot.lane.b32.xlu0 %v1251, 16
      %v1259 = vpop.permute.xlu0 %1258
      %1265 = vrot.lane.b32.xlu0 %v1192, 24
      %v1266 = vpop.permute.xlu0 %1265
      %1267 = vrot.lane.b32.xlu0 %v1194, 24
      %v1268 = vpop.permute.xlu0 %1267
      %1269 = vrot.lane.b32.xlu0 %v1196, 24
      %v1270 = vpop.permute.xlu0 %1269
      %1271 = vrot.lane.b32.xlu0 %v1202, 24
      %v1272 = vpop.permute.xlu0 %1271
      %v1278 = vrot.slane %v1202, 1
      %v1279 = vrot.slane %v1203, 1
      %v1280 = vsel %vm1214, %v1278, %v1279
      %1281 = vrot.lane.b32.xlu0 %v1220, 32
      %v1282 = vpop.permute.xlu0 %1281
      %1283 = vrot.lane.b32.xlu0 %v1223, 32
      %v1284 = vpop.permute.xlu0 %1283
      %1285 = vrot.lane.b32.xlu0 %v1226, 32
      %v1286 = vpop.permute.xlu0 %1285
      %1287 = vrot.lane.b32.xlu0 %v1280, 32
      %v1288 = vpop.permute.xlu0 %1287
      %v1293 = vrot.slane %v1202, 2
      %v1294 = vrot.slane %v1203, 2
      %v1295 = vsel %vm1239, %v1293, %v1294
      %1296 = vrot.lane.b32.xlu0 %v1245, 40
      %v1297 = vpop.permute.xlu0 %1296
      %1298 = vrot.lane.b32.xlu0 %v1248, 40
      %v1299 = vpop.permute.xlu0 %1298
      %1300 = vrot.lane.b32.xlu0 %v1251, 40
      %v1301 = vpop.permute.xlu0 %1300
      %1302 = vrot.lane.b32.xlu0 %v1295, 40
      %v1303 = vpop.permute.xlu0 %1302
      %1309 = vrot.lane.b32.xlu0 %v1194, 48
      %v1310 = vpop.permute.xlu0 %1309
      %1311 = vrot.lane.b32.xlu0 %v1196, 48
      %v1312 = vpop.permute.xlu0 %1311
      %1313 = vrot.lane.b32.xlu0 %v1202, 48
      %v1314 = vpop.permute.xlu0 %1313
      %1315 = vrot.lane.b32.xlu0 %v1204, 48
      %v1316 = vpop.permute.xlu0 %1315
      %v1322 = vrot.slane %v1204, 1
      %v1323 = vrot.slane %v1205, 1
      %v1324 = vsel %vm1214, %v1322, %v1323
      %1325 = vrot.lane.b32.xlu0 %v1223, 56
      %v1326 = vpop.permute.xlu0 %1325
      %1327 = vrot.lane.b32.xlu0 %v1226, 56
      %v1328 = vpop.permute.xlu0 %1327
      %1329 = vrot.lane.b32.xlu0 %v1280, 56
      %v1330 = vpop.permute.xlu0 %1329
      %1331 = vrot.lane.b32.xlu0 %v1324, 56
      %v1332 = vpop.permute.xlu0 %1331
      %v1337 = vrot.slane %v1204, 2
      %v1338 = vrot.slane %v1205, 2
      %v1339 = vsel %vm1239, %v1337, %v1338
      %1340 = vrot.lane.b32.xlu0 %v1248, 64
      %v1341 = vpop.permute.xlu0 %1340
      %1342 = vrot.lane.b32.xlu0 %v1251, 64
      %v1343 = vpop.permute.xlu0 %1342
      %1344 = vrot.lane.b32.xlu0 %v1295, 64
      %v1345 = vpop.permute.xlu0 %1344
      %1346 = vrot.lane.b32.xlu0 %v1339, 64
      %v1347 = vpop.permute.xlu0 %1346
      %v1352 = vsel %vm1058, %v1190, %v1228
      %v1353 = vsel %vm1058, %v1192, %v1230
      %v1354 = vsel %vm1058, %v1194, %v1232
      %v1355 = vsel %vm1058, %v1196, %v1234
      %v1356 = vsel %vm1092, %v1352, %v1253
      %v1357 = vsel %vm1092, %v1353, %v1255
      %v1358 = vsel %vm1092, %v1354, %v1257
      %v1359 = vsel %vm1092, %v1355, %v1259
      %v1360 = vsel %vm1126, %v1356, %v1266
      %v1361 = vsel %vm1126, %v1357, %v1268
      %v1362 = vsel %vm1126, %v1358, %v1270
      %v1363 = vsel %vm1126, %v1359, %v1272
      %v1364 = vsel %vm1160, %v1360, %v1282
      %v1365 = vsel %vm1160, %v1361, %v1284
      %v1366 = vsel %vm1160, %v1362, %v1286
      %v1367 = vsel %vm1160, %v1363, %v1288
      %vm1368 = vcmask 326656
      %v1369 = vsel %vm1368, %v1364, %v1297
      %v1370 = vsel %vm1368, %v1365, %v1299
      %v1371 = vsel %vm1368, %v1366, %v1301
      %v1372 = vsel %vm1368, %v1367, %v1303
      %vm1373 = vcmask 392192
      %v1374 = vsel %vm1373, %v1369, %v1310
      %v1375 = vsel %vm1373, %v1370, %v1312
      %v1376 = vsel %vm1373, %v1371, %v1314
      %v1377 = vsel %vm1373, %v1372, %v1316
      %vm1378 = vcmask 457728
      %v1379 = vsel %vm1378, %v1374, %v1326
      %v1380 = vsel %vm1378, %v1375, %v1328
      %v1381 = vsel %vm1378, %v1376, %v1330
      %v1382 = vsel %vm1378, %v1377, %v1332
      %vm1383 = vcmask 523264
      %v1384 = vsel %vm1383, %v1379, %v1341
      %v1385 = vsel %vm1383, %v1380, %v1343
      %v1386 = vsel %vm1383, %v1381, %v1345
      %v1387 = vsel %vm1383, %v1382, %v1347
      %v1388 = vpack.c.bf16 %v1385, %v1384
      %v1389 = vpack.c.bf16 %v1387, %v1386
      %v1390 = vld [vmem:[%s5] sm:$0xf]
      %v1391 = vld [vmem:[%s5 + $0x4] sm:$0xf]
      %v1392 = vld [vmem:[%s5 + $0x8] sm:$0xf]
      %v1393 = vld [vmem:[%s5 + $0xc] sm:$0xf]
      %v1394 = vld [vmem:[%s5 + $0x10] sm:$0xf]
      %v1395 = vld [vmem:[%s5 + $0x14] sm:$0xf]
      %v1396 = vld [vmem:[%s5 + $0x18] sm:$0xf]
      %v1397 = vld [vmem:[%s5 + $0x1c] sm:$0xf]
      %v1398 = vld [vmem:[%s5 + $0x20] sm:$0xf]
      %v1408 = vunpack.c.l.b16 %v1390
      %v1409 = vunpack.c.l.b16 %v1391
      %v1410 = vunpack.c.l.b16 %v1392
      %v1411 = vunpack.c.l.b16 %v1393
      %v1412 = vunpack.c.l.b16 %v1394
      %v1413 = vunpack.c.l.b16 %v1395
      %v1414 = vunpack.c.l.b16 %v1396
      %v1415 = vunpack.c.l.b16 %v1397
      %v1416 = vunpack.c.l.b16 %v1398
      %v1417 = vpack.c.b16 %v1409, %v1408
      %v1418 = vpack.c.b16 %v1411, %v1410
      %v1419 = vpack.c.b16 %v1413, %v1412
      %v1420 = vpack.c.b16 %v1415, %v1414
      %v1421 = vpack.c.b16 %v1416, %v1416
      %vm1426 = vcmask 588800
      %v1428 = vsel %vm1426, %v1388, 0
      %v1431 = vsel %vm1426, %v1389, 0
      %vm1433 = vcmask 1043456
      %v1435 = vsel %vm1433, %v1421, 0
      %1437 = vmatprep.subr.bf16.mxu0 0
      %1438 = vmatpush1.bf16.msra.mxu0 0
      %1439 = vmatprep.subr.bf16.mxu0 0
      %1440 = vmatpush1.bf16.msra.mxu0 0
      %1441 = vmatprep.subr.bf16.mxu0 0
      %1442 = vmatpush1.bf16.msra.mxu0 0
      %1443 = vmatprep.subr.bf16.mxu0 0
      %1444 = vmatpush1.bf16.msra.mxu0 %v1435
      %1445 = vmatprep.subr.bf16.mxu0 0
      %1446 = vmatpush1.bf16.msra.mxu0 %v1420
      %1447 = vmatprep.subr.bf16.mxu0 0
      %1448 = vmatpush1.bf16.msra.mxu0 %v1419
      %1449 = vmatprep.subr.bf16.mxu0 0
      %1450 = vmatpush1.bf16.msra.mxu0 %v1418
      %1451 = vmatprep.subr.bf16.mxu0 0
      %1452 = vmatpush1.bf16.msra.mxu0 %v1417
      %1453 = vmatprep.subr.bf16.mxu0 0
      %1454 = vmatpush2.bf16.msra.mxu0 0
      %1455 = vmatprep.subr.bf16.mxu0 0
      %1456 = vmatpush2.bf16.msra.mxu0 0
      %1457 = vmatprep.subr.bf16.mxu0 0
      %1458 = vmatpush2.bf16.msra.mxu0 0
      %1459 = vmatprep.subr.bf16.mxu0 0
      %1460 = vmatpush2.bf16.msra.mxu0 0
      %1461 = vmatprep.subr.bf16.mxu0 0
      %1462 = vmatpush2.bf16.msra.mxu0 0
      %1463 = vmatprep.subr.bf16.mxu0 0
      %1464 = vmatpush2.bf16.msra.mxu0 0
      %1465 = vmatprep.subr.bf16.mxu0 0
      %1466 = vmatpush2.bf16.msra.mxu0 0
      %1467 = vmatprep.subr.bf16.mxu0 0
      %1468 = vmatpush2.bf16.msra.mxu0 0
      %1469 = vmatprep.mubr.bf16.mxu0 0
      %1470 = vmatmul.mubr.bf16.gmra.mxu0 %v1428
      %v1471 = vpop.f32.mrf.mxu0
      %v1472 = vadd.f32 0.0, %v1471
      %v1473 = vpop.f32.mrf.mxu0
      %v1474 = vpop.f32.mrf.mxu0
      %v1475 = vadd.f32 0.0, %v1474
      %v1476 = vpop.f32.mrf.mxu0
      %1477 = vmatprep.mubr.bf16.mxu0 0
      %1478 = vmatmul.mubr.bf16.gmra.mxu0 %v1431
      %v1479 = vpop.f32.mrf.mxu0
      %v1480 = vadd.f32 0.0, %v1479
      %v1481 = vpop.f32.mrf.mxu0
      %v1482 = vpop.f32.mrf.mxu0
      %v1483 = vadd.f32 0.0, %v1482
      %v1484 = vpop.f32.mrf.mxu0
      %1485 = vdwg.mxu0
      %v1486 = vld [vmem:[%s6] sm:$0xf]
      %v1487 = vld [vmem:[%s6 + $0x4] sm:$0xf]
      %v1488 = vld [vmem:[%s6 + $0x8] sm:$0xf]
      %v1489 = vld [vmem:[%s6 + $0xc] sm:$0xf]
      %v1490 = vld [vmem:[%s6 + $0x10] sm:$0xf]
      %v1491 = vld [vmem:[%s6 + $0x14] sm:$0xf]
      %v1492 = vld [vmem:[%s6 + $0x18] sm:$0xf]
      %v1493 = vld [vmem:[%s6 + $0x1c] sm:$0xf]
      %v1494 = vld [vmem:[%s6 + $0x20] sm:$0xf]
      %v1495 = vld [vmem:[%s9] sm:$0x1]
      %v1497 = vlaneseq
      %v1498 = vshrl.u32 %v1497, 7
      %v1499 = vsub.s32 0, %v1498
      %v1500 = vrot.slane %v1495, %v1499
      %v1511 = vunpack.c.l.b16 %v1486
      %v1512 = vunpack.c.l.b16 %v1487
      %v1513 = vunpack.c.l.b16 %v1488
      %v1514 = vunpack.c.l.b16 %v1489
      %v1515 = vunpack.c.l.b16 %v1490
      %v1516 = vunpack.c.l.b16 %v1491
      %v1517 = vunpack.c.l.b16 %v1492
      %v1518 = vunpack.c.l.b16 %v1493
      %v1519 = vunpack.c.l.b16 %v1494
      %v1520 = vpack.c.b16 %v1512, %v1511
      %v1521 = vpack.c.b16 %v1514, %v1513
      %v1522 = vpack.c.b16 %v1516, %v1515
      %v1523 = vpack.c.b16 %v1518, %v1517
      %v1524 = vpack.c.b16 %v1519, %v1519
      %v1530 = vsel %vm1433, %v1524, 0
      %1532 = vmatprep.subr.bf16.mxu0 0
      %1533 = vmatpush1.bf16.msra.mxu0 0
      %1534 = vmatprep.subr.bf16.mxu0 0
      %1535 = vmatpush1.bf16.msra.mxu0 0
      %1536 = vmatprep.subr.bf16.mxu0 0
      %1537 = vmatpush1.bf16.msra.mxu0 0
      %1538 = vmatprep.subr.bf16.mxu0 0
      %1539 = vmatpush1.bf16.msra.mxu0 %v1530
      %1540 = vmatprep.subr.bf16.mxu0 0
      %1541 = vmatpush1.bf16.msra.mxu0 %v1523
      %1542 = vmatprep.subr.bf16.mxu0 0
      %1543 = vmatpush1.bf16.msra.mxu0 %v1522
      %1544 = vmatprep.subr.bf16.mxu0 0
      %1545 = vmatpush1.bf16.msra.mxu0 %v1521
      %1546 = vmatprep.subr.bf16.mxu0 0
      %1547 = vmatpush1.bf16.msra.mxu0 %v1520
      %1548 = vmatprep.subr.bf16.mxu0 0
      %1549 = vmatpush2.bf16.msra.mxu0 0
      %1550 = vmatprep.subr.bf16.mxu0 0
      %1551 = vmatpush2.bf16.msra.mxu0 0
      %1552 = vmatprep.subr.bf16.mxu0 0
      %1553 = vmatpush2.bf16.msra.mxu0 0
      %1554 = vmatprep.subr.bf16.mxu0 0
      %1555 = vmatpush2.bf16.msra.mxu0 0
      %1556 = vmatprep.subr.bf16.mxu0 0
      %1557 = vmatpush2.bf16.msra.mxu0 0
      %1558 = vmatprep.subr.bf16.mxu0 0
      %1559 = vmatpush2.bf16.msra.mxu0 0
      %1560 = vmatprep.subr.bf16.mxu0 0
      %1561 = vmatpush2.bf16.msra.mxu0 0
      %1562 = vmatprep.subr.bf16.mxu0 0
      %1563 = vmatpush2.bf16.msra.mxu0 0
      %1564 = vmatprep.mubr.bf16.mxu0 0
      %1565 = vmatmul.mubr.bf16.gmra.mxu0 %v1428
      %v1566 = vpop.f32.mrf.mxu0
      %v1567 = vadd.f32 %v1500, %v1566
      %v1568 = vpop.f32.mrf.mxu0
      %v1569 = vpop.f32.mrf.mxu0
      %v1570 = vadd.f32 %v1500, %v1569
      %v1571 = vpop.f32.mrf.mxu0
      %1572 = vmatprep.mubr.bf16.mxu0 0
      %1573 = vmatmul.mubr.bf16.gmra.mxu0 %v1431
      %v1574 = vpop.f32.mrf.mxu0
      %v1575 = vadd.f32 %v1500, %v1574
      %v1576 = vpop.f32.mrf.mxu0
      %v1577 = vpop.f32.mrf.mxu0
      %v1578 = vadd.f32 %v1500, %v1577
      %v1579 = vpop.f32.mrf.mxu0
      %1580 = vdwg.mxu0
      %v1581 = vmax.f32 %v1567, 0.0
      %v1582 = vmax.f32 %v1570, 0.0
      %v1583 = vmax.f32 %v1575, 0.0
      %v1584 = vmax.f32 %v1578, 0.0
      %1585 = vst.msk [vmem:[%s648] sm:$0xff] %vm1041, %v1581
      %1586 = vst.msk [vmem:[%s648 + $0x8] sm:$0xff] %vm1041, %v1582
      %1587 = vst.msk [vmem:[%s648 + $0x10] sm:$0xff] %vm1041, %v1583
      %1588 = vst.msk [vmem:[%s648 + $0x18] sm:$0xff] %vm1041, %v1584
      %v1589 = vld [vmem:[%s7] sm:$0xff]
      %v1590 = vld [vmem:[%s7 + $0x8] sm:$0xff]
      %v1591 = vld [vmem:[%s7 + $0x10] sm:$0xff]
      %v1592 = vld [vmem:[%s7 + $0x18] sm:$0xff]
      %v1593 = vld [vmem:[%s7 + $0x20] sm:$0xff]
      %v1594 = vld [vmem:[%s7 + $0x28] sm:$0xff]
      %v1595 = vld [vmem:[%s7 + $0x30] sm:$0xff]
      %v1596 = vld [vmem:[%s7 + $0x38] sm:$0xff]
      %v1597 = vld [vmem:[%s7 + $0x40] sm:$0xff]
      %v1598 = vld [vmem:[%s7 + $0x48] sm:$0xff]
      %v1599 = vld [vmem:[%s7 + $0x50] sm:$0xff]
      %v1600 = vld [vmem:[%s7 + $0x58] sm:$0xff]
      %v1601 = vld [vmem:[%s7 + $0x60] sm:$0xff]
      %v1602 = vld [vmem:[%s7 + $0x68] sm:$0xff]
      %v1603 = vld [vmem:[%s7 + $0x70] sm:$0xff]
      %v1604 = vld [vmem:[%s7 + $0x78] sm:$0xff]
      %v1606 = vsel %vm1160, %v1589, 0
      %v1609 = vsel %vm1160, %v1590, 0
      %v1612 = vsel %vm1160, %v1591, 0
      %v1615 = vsel %vm1160, %v1592, 0
      %v1618 = vsel %vm1160, %v1593, 0
      %v1621 = vsel %vm1160, %v1594, 0
      %v1624 = vsel %vm1160, %v1595, 0
      %v1627 = vsel %vm1160, %v1596, 0
      %v1630 = vsel %vm1160, %v1597, 0
      %v1633 = vsel %vm1160, %v1598, 0
      %v1636 = vsel %vm1160, %v1599, 0
      %v1639 = vsel %vm1160, %v1600, 0
      %v1642 = vsel %vm1160, %v1601, 0
      %v1645 = vsel %vm1160, %v1602, 0
      %v1648 = vsel %vm1160, %v1603, 0
      %v1651 = vsel %vm1160, %v1604, 0
      %1653 = vmatprep.subr.mxu0 0.0
      %1654 = vmatpush1.msra.mxu0 0.0
      %1655 = vmatprep.subr.mxu0 0.0
      %1656 = vmatpush1.msra.mxu0 0.0
      %1657 = vmatprep.subr.mxu0 0.0
      %1658 = vmatpush1.msra.mxu0 0.0
      %1659 = vmatprep.subr.mxu0 0.0
      %1660 = vmatpush1.msra.mxu0 0.0
      %1661 = vmatprep.subr.mxu0 0.0
      %1662 = vmatpush1.msra.mxu0 0.0
      %1663 = vmatprep.subr.mxu0 0.0
      %1664 = vmatpush1.msra.mxu0 0.0
      %1665 = vmatprep.subr.mxu0 0.0
      %1666 = vmatpush1.msra.mxu0 0.0
      %1667 = vmatprep.subr.mxu0 0.0
      %1668 = vmatpush1.msra.mxu0 0.0
      %1669 = vmatprep.subr.mxu0 0.0
      %1670 = vmatpush1.msra.mxu0 0.0
      %1671 = vmatprep.subr.mxu0 0.0
      %1672 = vmatpush1.msra.mxu0 0.0
      %1673 = vmatprep.subr.mxu0 0.0
      %1674 = vmatpush1.msra.mxu0 0.0
      %1675 = vmatprep.subr.mxu0 0.0
      %1676 = vmatpush1.msra.mxu0 0.0
      %1677 = vmatprep.subr.mxu0 0.0
      %1678 = vmatpush1.msra.mxu0 %v1483
      %1679 = vmatprep.subr.mxu0 0.0
      %1680 = vmatpush1.msra.mxu0 %v1480
      %1681 = vmatprep.subr.mxu0 0.0
      %1682 = vmatpush1.msra.mxu0 %v1475
      %1683 = vmatprep.subr.mxu0 0.0
      %1684 = vmatpush1.msra.mxu0 %v1472
      %1685 = vmatprep.subr.mxu0 0.0
      %1686 = vmatpush2.msra.mxu0 0.0
      %1687 = vmatprep.subr.mxu0 0.0
      %1688 = vmatpush2.msra.mxu0 0.0
      %1689 = vmatprep.subr.mxu0 0.0
      %1690 = vmatpush2.msra.mxu0 0.0
      %1691 = vmatprep.subr.mxu0 0.0
      %1692 = vmatpush2.msra.mxu0 0.0
      %1693 = vmatprep.subr.mxu0 0.0
      %1694 = vmatpush2.msra.mxu0 0.0
      %1695 = vmatprep.subr.mxu0 0.0
      %1696 = vmatpush2.msra.mxu0 0.0
      %1697 = vmatprep.subr.mxu0 0.0
      %1698 = vmatpush2.msra.mxu0 0.0
      %1699 = vmatprep.subr.mxu0 0.0
      %1700 = vmatpush2.msra.mxu0 0.0
      %1701 = vmatprep.subr.mxu0 0.0
      %1702 = vmatpush2.msra.mxu0 0.0
      %1703 = vmatprep.subr.mxu0 0.0
      %1704 = vmatpush2.msra.mxu0 0.0
      %1705 = vmatprep.subr.mxu0 0.0
      %1706 = vmatpush2.msra.mxu0 0.0
      %1707 = vmatprep.subr.mxu0 0.0
      %1708 = vmatpush2.msra.mxu0 0.0
      %1709 = vmatprep.subr.mxu0 0.0
      %1710 = vmatpush2.msra.mxu0 0.0
      %1711 = vmatprep.subr.mxu0 0.0
      %1712 = vmatpush2.msra.mxu0 0.0
      %1713 = vmatprep.subr.mxu0 0.0
      %1714 = vmatpush2.msra.mxu0 0.0
      %1715 = vmatprep.subr.mxu0 0.0
      %1716 = vmatpush2.msra.mxu0 0.0
      %1717 = vmatprep.mubr.f32.mxu0 0.0
      %1718 = vmatmul.mubr.f32.gmra.mxu0 %v1606
      %v1719 = vpop.f32.mrf.mxu0
      %v1720 = vadd.f32 0.0, %v1719
      %v1721 = vpop.f32.mrf.mxu0
      %1722 = vmatprep.mubr.f32.mxu0 0.0
      %1723 = vmatmul.mubr.f32.gmra.mxu0 %v1609
      %v1724 = vpop.f32.mrf.mxu0
      %v1725 = vadd.f32 0.0, %v1724
      %v1726 = vpop.f32.mrf.mxu0
      %1727 = vmatprep.mubr.f32.mxu0 0.0
      %1728 = vmatmul.mubr.f32.gmra.mxu0 %v1612
      %v1729 = vpop.f32.mrf.mxu0
      %v1730 = vadd.f32 0.0, %v1729
      %v1731 = vpop.f32.mrf.mxu0
      %1732 = vmatprep.mubr.f32.mxu0 0.0
      %1733 = vmatmul.mubr.f32.gmra.mxu0 %v1615
      %v1734 = vpop.f32.mrf.mxu0
      %v1735 = vadd.f32 0.0, %v1734
      %v1736 = vpop.f32.mrf.mxu0
      %1737 = vmatprep.mubr.f32.mxu0 0.0
      %1738 = vmatmul.mubr.f32.gmra.mxu0 %v1618
      %v1739 = vpop.f32.mrf.mxu0
      %v1740 = vadd.f32 0.0, %v1739
      %v1741 = vpop.f32.mrf.mxu0
      %1742 = vmatprep.mubr.f32.mxu0 0.0
      %1743 = vmatmul.mubr.f32.gmra.mxu0 %v1621
      %v1744 = vpop.f32.mrf.mxu0
      %v1745 = vadd.f32 0.0, %v1744
      %v1746 = vpop.f32.mrf.mxu0
      %1747 = vmatprep.mubr.f32.mxu0 0.0
      %1748 = vmatmul.mubr.f32.gmra.mxu0 %v1624
      %v1749 = vpop.f32.mrf.mxu0
      %v1750 = vadd.f32 0.0, %v1749
      %v1751 = vpop.f32.mrf.mxu0
      %1752 = vmatprep.mubr.f32.mxu0 0.0
      %1753 = vmatmul.mubr.f32.gmra.mxu0 %v1627
      %v1754 = vpop.f32.mrf.mxu0
      %v1755 = vadd.f32 0.0, %v1754
      %v1756 = vpop.f32.mrf.mxu0
      %1757 = vmatprep.mubr.f32.mxu0 0.0
      %1758 = vmatmul.mubr.f32.gmra.mxu0 %v1630
      %v1759 = vpop.f32.mrf.mxu0
      %v1760 = vadd.f32 0.0, %v1759
      %v1761 = vpop.f32.mrf.mxu0
      %1762 = vmatprep.mubr.f32.mxu0 0.0
      %1763 = vmatmul.mubr.f32.gmra.mxu0 %v1633
      %v1764 = vpop.f32.mrf.mxu0
      %v1765 = vadd.f32 0.0, %v1764
      %v1766 = vpop.f32.mrf.mxu0
      %1767 = vmatprep.mubr.f32.mxu0 0.0
      %1768 = vmatmul.mubr.f32.gmra.mxu0 %v1636
      %v1769 = vpop.f32.mrf.mxu0
      %v1770 = vadd.f32 0.0, %v1769
      %v1771 = vpop.f32.mrf.mxu0
      %1772 = vmatprep.mubr.f32.mxu0 0.0
      %1773 = vmatmul.mubr.f32.gmra.mxu0 %v1639
      %v1774 = vpop.f32.mrf.mxu0
      %v1775 = vadd.f32 0.0, %v1774
      %v1776 = vpop.f32.mrf.mxu0
      %1777 = vmatprep.mubr.f32.mxu0 0.0
      %1778 = vmatmul.mubr.f32.gmra.mxu0 %v1642
      %v1779 = vpop.f32.mrf.mxu0
      %v1780 = vadd.f32 0.0, %v1779
      %v1781 = vpop.f32.mrf.mxu0
      %1782 = vmatprep.mubr.f32.mxu0 0.0
      %1783 = vmatmul.mubr.f32.gmra.mxu0 %v1645
      %v1784 = vpop.f32.mrf.mxu0
      %v1785 = vadd.f32 0.0, %v1784
      %v1786 = vpop.f32.mrf.mxu0
      %1787 = vmatprep.mubr.f32.mxu0 0.0
      %1788 = vmatmul.mubr.f32.gmra.mxu0 %v1648
      %v1789 = vpop.f32.mrf.mxu0
      %v1790 = vadd.f32 0.0, %v1789
      %v1791 = vpop.f32.mrf.mxu0
      %1792 = vmatprep.mubr.f32.mxu0 0.0
      %1793 = vmatmul.mubr.f32.gmra.mxu0 %v1651
      %v1794 = vpop.f32.mrf.mxu0
      %v1795 = vadd.f32 0.0, %v1794
      %v1796 = vpop.f32.mrf.mxu0
      %1797 = vdwg.mxu0
      %v1803 = vunpack.c.l.b16 %v1177
      %v1804 = vunpack.c.l.b16 %v1178
      %v1805 = vunpack.c.l.b16 %v1179
      %v1806 = vunpack.c.l.b16 %v1180
      %v1807 = vunpack.c.l.b16 %v1181
      %v1808 = vpack.c.b16 %v1804, %v1803
      %v1809 = vpack.c.b16 %v1806, %v1805
      %v1810 = vpack.c.b16 %v1807, %v1807
      %vm1813 = vcmask 293888
      %v1814 = vsel %vm1813, %v1162, 0
      %v1816 = vsel %vm1813, %v1164, 0
      %v1818 = vsel %vm1813, %v1166, 0
      %v1820 = vsel %vm1813, %v1168, 0
      %v1822 = vsel %vm1813, %v1170, 0
      %v1824 = vsel %vm1813, %v1172, 0
      %v1826 = vsel %vm1813, %v1174, 0
      %v1828 = vsel %vm1813, %v1176, 0
      %vm1830 = vcmask 1041408
      %v1832 = vsel %vm1830, %v1810, 0
      %1834 = vmatprep.subr.bf16.mxu0 0
      %1835 = vmatpush1.bf16.msra.mxu0 0
      %1836 = vmatprep.subr.bf16.mxu0 0
      %1837 = vmatpush1.bf16.msra.mxu0 0
      %1838 = vmatprep.subr.bf16.mxu0 0
      %1839 = vmatpush1.bf16.msra.mxu0 0
      %1840 = vmatprep.subr.bf16.mxu0 0
      %1841 = vmatpush1.bf16.msra.mxu0 0
      %1842 = vmatprep.subr.bf16.mxu0 0
      %1843 = vmatpush1.bf16.msra.mxu0 0
      %1844 = vmatprep.subr.bf16.mxu0 0
      %1845 = vmatpush1.bf16.msra.mxu0 %v1832
      %1846 = vmatprep.subr.bf16.mxu0 0
      %1847 = vmatpush1.bf16.msra.mxu0 %v1809
      %1848 = vmatprep.subr.bf16.mxu0 0
      %1849 = vmatpush1.bf16.msra.mxu0 %v1808
      %1850 = vmatprep.subr.bf16.mxu0 0
      %1851 = vmatpush2.bf16.msra.mxu0 0
      %1852 = vmatprep.subr.bf16.mxu0 0
      %1853 = vmatpush2.bf16.msra.mxu0 0
      %1854 = vmatprep.subr.bf16.mxu0 0
      %1855 = vmatpush2.bf16.msra.mxu0 0
      %1856 = vmatprep.subr.bf16.mxu0 0
      %1857 = vmatpush2.bf16.msra.mxu0 0
      %1858 = vmatprep.subr.bf16.mxu0 0
      %1859 = vmatpush2.bf16.msra.mxu0 0
      %1860 = vmatprep.subr.bf16.mxu0 0
      %1861 = vmatpush2.bf16.msra.mxu0 0
      %1862 = vmatprep.subr.bf16.mxu0 0
      %1863 = vmatpush2.bf16.msra.mxu0 0
      %1864 = vmatprep.subr.bf16.mxu0 0
      %1865 = vmatpush2.bf16.msra.mxu0 0
      %1866 = vmatprep.mubr.bf16.mxu0 0
      %1867 = vmatmul.mubr.bf16.gmra.mxu0 %v1814
      %v1868 = vpop.f32.mrf.mxu0
      %v1869 = vadd.f32 %v1720, %v1868
      %v1870 = vpop.f32.mrf.mxu0
      %v1871 = vpop.f32.mrf.mxu0
      %v1872 = vadd.f32 %v1725, %v1871
      %v1873 = vpop.f32.mrf.mxu0
      %1874 = vmatprep.mubr.bf16.mxu0 0
      %1875 = vmatmul.mubr.bf16.gmra.mxu0 %v1816
      %v1876 = vpop.f32.mrf.mxu0
      %v1877 = vadd.f32 %v1730, %v1876
      %v1878 = vpop.f32.mrf.mxu0
      %v1879 = vpop.f32.mrf.mxu0
      %v1880 = vadd.f32 %v1735, %v1879
      %v1881 = vpop.f32.mrf.mxu0
      %1882 = vmatprep.mubr.bf16.mxu0 0
      %1883 = vmatmul.mubr.bf16.gmra.mxu0 %v1818
      %v1884 = vpop.f32.mrf.mxu0
      %v1885 = vadd.f32 %v1740, %v1884
      %v1886 = vpop.f32.mrf.mxu0
      %v1887 = vpop.f32.mrf.mxu0
      %v1888 = vadd.f32 %v1745, %v1887
      %v1889 = vpop.f32.mrf.mxu0
      %1890 = vmatprep.mubr.bf16.mxu0 0
      %1891 = vmatmul.mubr.bf16.gmra.mxu0 %v1820
      %v1892 = vpop.f32.mrf.mxu0
      %v1893 = vadd.f32 %v1750, %v1892
      %v1894 = vpop.f32.mrf.mxu0
      %v1895 = vpop.f32.mrf.mxu0
      %v1896 = vadd.f32 %v1755, %v1895
      %v1897 = vpop.f32.mrf.mxu0
      %1898 = vmatprep.mubr.bf16.mxu0 0
      %1899 = vmatmul.mubr.bf16.gmra.mxu0 %v1822
      %v1900 = vpop.f32.mrf.mxu0
      %v1901 = vadd.f32 %v1760, %v1900
      %v1902 = vpop.f32.mrf.mxu0
      %v1903 = vpop.f32.mrf.mxu0
      %v1904 = vadd.f32 %v1765, %v1903
      %v1905 = vpop.f32.mrf.mxu0
      %1906 = vmatprep.mubr.bf16.mxu0 0
      %1907 = vmatmul.mubr.bf16.gmra.mxu0 %v1824
      %v1908 = vpop.f32.mrf.mxu0
      %v1909 = vadd.f32 %v1770, %v1908
      %v1910 = vpop.f32.mrf.mxu0
      %v1911 = vpop.f32.mrf.mxu0
      %v1912 = vadd.f32 %v1775, %v1911
      %v1913 = vpop.f32.mrf.mxu0
      %1914 = vmatprep.mubr.bf16.mxu0 0
      %1915 = vmatmul.mubr.bf16.gmra.mxu0 %v1826
      %v1916 = vpop.f32.mrf.mxu0
      %v1917 = vadd.f32 %v1780, %v1916
      %v1918 = vpop.f32.mrf.mxu0
      %v1919 = vpop.f32.mrf.mxu0
      %v1920 = vadd.f32 %v1785, %v1919
      %v1921 = vpop.f32.mrf.mxu0
      %1922 = vmatprep.mubr.bf16.mxu0 0
      %1923 = vmatmul.mubr.bf16.gmra.mxu0 %v1828
      %v1924 = vpop.f32.mrf.mxu0
      %v1925 = vadd.f32 %v1790, %v1924
      %v1926 = vpop.f32.mrf.mxu0
      %v1927 = vpop.f32.mrf.mxu0
      %v1928 = vadd.f32 %v1795, %v1927
      %v1929 = vpop.f32.mrf.mxu0
      %1930 = vdwg.mxu0
      %v1931 = vld [vmem:[%s8] sm:$0x1]
      %v1933 = vlaneseq
      %v1934 = vshrl.u32 %v1933, 7
      %v1935 = vsub.s32 0, %v1934
      %v1936 = vrot.slane %v1931, %v1935
      %v1938 = vadd.f32 %v1869, %v1936
      %v1939 = vadd.f32 %v1872, %v1936
      %v1940 = vadd.f32 %v1877, %v1936
      %v1941 = vadd.f32 %v1880, %v1936
      %v1942 = vadd.f32 %v1885, %v1936
      %v1943 = vadd.f32 %v1888, %v1936
      %v1944 = vadd.f32 %v1893, %v1936
      %v1945 = vadd.f32 %v1896, %v1936
      %v1946 = vadd.f32 %v1901, %v1936
      %v1947 = vadd.f32 %v1904, %v1936
      %v1948 = vadd.f32 %v1909, %v1936
      %v1949 = vadd.f32 %v1912, %v1936
      %v1950 = vadd.f32 %v1917, %v1936
      %v1951 = vadd.f32 %v1920, %v1936
      %v1952 = vadd.f32 %v1925, %v1936
      %v1953 = vadd.f32 %v1928, %v1936
      %v1954 = vmax.f32 %v1938, 0.0
      %v1955 = vmax.f32 %v1939, 0.0
      %v1956 = vmax.f32 %v1940, 0.0
      %v1957 = vmax.f32 %v1941, 0.0
      %v1958 = vmax.f32 %v1942, 0.0
      %v1959 = vmax.f32 %v1943, 0.0
      %v1960 = vmax.f32 %v1944, 0.0
      %v1961 = vmax.f32 %v1945, 0.0
      %v1962 = vmax.f32 %v1946, 0.0
      %v1963 = vmax.f32 %v1947, 0.0
      %v1964 = vmax.f32 %v1948, 0.0
      %v1965 = vmax.f32 %v1949, 0.0
      %v1966 = vmax.f32 %v1950, 0.0
      %v1967 = vmax.f32 %v1951, 0.0
      %v1968 = vmax.f32 %v1952, 0.0
      %v1969 = vmax.f32 %v1953, 0.0
      %1970 = vst.msk [vmem:[%s638] sm:$0xff] %vm1041, %v1954
      %1971 = vst.msk [vmem:[%s638 + $0x8] sm:$0xff] %vm1041, %v1955
      %1972 = vst.msk [vmem:[%s638 + $0x10] sm:$0xff] %vm1041, %v1956
      %1973 = vst.msk [vmem:[%s638 + $0x18] sm:$0xff] %vm1041, %v1957
      %1974 = vst.msk [vmem:[%s638 + $0x20] sm:$0xff] %vm1041, %v1958
      %1975 = vst.msk [vmem:[%s638 + $0x28] sm:$0xff] %vm1041, %v1959
      %1976 = vst.msk [vmem:[%s638 + $0x30] sm:$0xff] %vm1041, %v1960
      %1977 = vst.msk [vmem:[%s638 + $0x38] sm:$0xff] %vm1041, %v1961
      %1978 = vst.msk [vmem:[%s638 + $0x40] sm:$0xff] %vm1041, %v1962
      %1979 = vst.msk [vmem:[%s638 + $0x48] sm:$0xff] %vm1041, %v1963
      %1980 = vst.msk [vmem:[%s638 + $0x50] sm:$0xff] %vm1041, %v1964
      %1981 = vst.msk [vmem:[%s638 + $0x58] sm:$0xff] %vm1041, %v1965
      %1982 = vst.msk [vmem:[%s638 + $0x60] sm:$0xff] %vm1041, %v1966
      %1983 = vst.msk [vmem:[%s638 + $0x68] sm:$0xff] %vm1041, %v1967
      %1984 = vst.msk [vmem:[%s638 + $0x70] sm:$0xff] %vm1041, %v1968
      %1985 = vst.msk [vmem:[%s638 + $0x78] sm:$0xff] %vm1041, %v1969
      %s1986 = smul.u32 8, %s28
      %p1987 = scmp.lt.s32.totalorder %s27, 1
      %s1988 = scalar_select %p1987, %s27, 1
      %p1989 = scmp.lt.s32.totalorder %s1986, 15
      %s1990 = scalar_select %p1989, %s1986, 15
      %s1991 = smul.addr %s1990, 2
      %s1992 = smul.addr %s1988, 32
      %s1993 = sadd.s32 %s1991, %s1992
      %s1994 = smul.addr %s1993, 8
      %s1995 = scalar_lea.vmem %s10, %s1994
      %s1996 = smul.u32 4, %s28
      %p1997 = scmp.lt.s32.totalorder %s27, 1
      %s1998 = scalar_select %p1997, %s27, 1
      %p1999 = scmp.lt.s32.totalorder %s1996, 7
      %s2000 = scalar_select %p1999, %s1996, 7
      %s2001 = smul.addr %s1998, 8
      %s2002 = sadd.s32 %s2000, %s2001
      %s2003 = smul.addr %s2002, 8
      %s2004 = scalar_lea.vmem %s11, %s2003
      // Predicated region
      $region61: #{_lambda_.1} parent=59 // pred_check
        %p2005 = pneg %p301
      $region62: #{_lambda_.1} parent=59 // pred_check_branch
        %2007 = sbr.rel (%p2005) target = $region64
      $region63: #{_lambda_.1} parent=59 // pred_region
        %s2008 = smul.u32 8, %s28
      $region64: #{_lambda_.1} parent=59 // pred_fallthru
        _
      // Predicated region
      $region65: #{_lambda_.1} parent=59 // pred_check
        %p2009 = pneg %p329
      $region66: #{_lambda_.1} parent=59 // pred_check_branch
        %2011 = sbr.rel (%p2009) target = $region68
      $region67: #{_lambda_.1} parent=59 // pred_region
        %s2012 = smul.u32 4, %s28
      $region68: #{_lambda_.1} parent=59 // pred_fallthru
        _
    $region60: #{_lambda_.1} parent=5 // pred_fallthru
      _
    %p2013 = scmp.le.s32.totalorder 2, %s18
    // Predicated region
    $region69: #{_lambda_.1} parent=5 // pred_check
      %p2014 = pneg %p2013
    $region70: #{_lambda_.1} parent=5 // pred_check_branch
      %2016 = sbr.rel (%p2014) target = $region72
    $region71: #{_lambda_.1} parent=5 // pred_region
      %s2017 = ssub.s32 %s18, 2
      // Predicated region
      $region73: #{_lambda_.1} parent=71 // pred_check
        %p2018 = pneg %p307
      $region74: #{_lambda_.1} parent=71 // pred_check_branch
        %2020 = sbr.rel (%p2018) target = $region76
      $region75: #{_lambda_.1} parent=71 // pred_region
        %s2021 = smul.u32 8, %s30
        %p2022 = scmp.lt.s32.totalorder %s29, 1
        %s2023 = scalar_select %p2022, %s29, 1
        %p2024 = scmp.lt.s32.totalorder %s2021, 15
        %s2025 = scalar_select %p2024, %s2021, 15
        %s2026 = smul.addr %s2025, 2
        %s2027 = smul.addr %s2023, 32
        %s2028 = sadd.s32 %s2026, %s2027
        %s2029 = smul.addr %s2028, 8
        %s2030 = scalar_lea.vmem %s10, %s2029
      $region76: #{_lambda_.1} parent=71 // pred_fallthru
        _
      // Predicated region
      $region77: #{_lambda_.1} parent=71 // pred_check
        %p2031 = pneg %p335
      $region78: #{_lambda_.1} parent=71 // pred_check_branch
        %2033 = sbr.rel (%p2031) target = $region80
      $region79: #{_lambda_.1} parent=71 // pred_region
        %s2034 = smul.u32 4, %s30
        %p2035 = scmp.lt.s32.totalorder %s29, 1
        %s2036 = scalar_select %p2035, %s29, 1
        %p2037 = scmp.lt.s32.totalorder %s2034, 7
        %s2038 = scalar_select %p2037, %s2034, 7
        %s2039 = smul.addr %s2036, 8
        %s2040 = sadd.s32 %s2038, %s2039
        %s2041 = smul.addr %s2040, 8
        %s2042 = scalar_lea.vmem %s11, %s2041
      $region80: #{_lambda_.1} parent=71 // pred_fallthru
        _
    $region72: #{_lambda_.1} parent=5 // pred_fallthru
      _
  $region6: #{_lambda_.1} parent=0 // loop_footer
    %s22 = sadd.s32 1, %s18
  $region7: #{_lambda_.1} parent=0 // loop_footer_branch
    %17 = sbr.rel target = $region3
  $region8: #{_lambda_.1} parent=0 // loop_exit
    _

</llo_original>
